<compile_context>
chip_gen: v6e
topology: v6e:2x2x1
jax: 0.10.0
libtpu: 0.0.40
codegen_flags: <defaults>
</compile_context>

<pallas_src>
import jax
import jax.numpy as jnp
from jax.experimental import pallas as pl
from jax.experimental.pallas import tpu as pltpu

HIDDEN = 32
IN_FEATURES = 5
OUT_FEATURES = 2

# Rows of the (flattened) batch handled per grid step; they map to vector lanes,
# so this must be a multiple of 128. 512-2048 amortizes per-step overhead.
TILE_COLS = 1024


def _mlp_kernel(x_ref,
                w1_ref, b1_ref,
                w2_ref, b2_ref,
                w3_ref, b3_ref,
                w4_ref, b4_ref,
                w5_ref, b5_ref,
                o_ref):
    """Fused 5-layer MLP in feature-major layout.

    x_ref:  (5, TILE)         -- batch on lanes
    w*_ref: (out, in)         -- PyTorch nn.Linear weight layout
    b*_ref: (out, 1)          -- broadcast across lanes
    o_ref:  (2, TILE)
    """
    h = x_ref[...]                                                       # (5, T)
    h = jnp.tanh(jnp.dot(w1_ref[...], h,
                         preferred_element_type=jnp.float32) + b1_ref[...])   # (32, T)
    h = jnp.tanh(jnp.dot(w2_ref[...], h,
                         preferred_element_type=jnp.float32) + b2_ref[...])
    h = jnp.tanh(jnp.dot(w3_ref[...], h,
                         preferred_element_type=jnp.float32) + b3_ref[...])
    h = jnp.tanh(jnp.dot(w4_ref[...], h,
                         preferred_element_type=jnp.float32) + b4_ref[...])
    out = jnp.dot(w5_ref[...], h,
                  preferred_element_type=jnp.float32) + b5_ref[...]           # (2, T)
    o_ref[...] = out.astype(o_ref.dtype)


def _resident_spec(shape):
    # Full-array block with a constant block index: stays VMEM-resident across
    # the batch grid (the pipeliner does not re-issue its DMA each step).
    return pl.BlockSpec(shape, lambda i: tuple(0 for _ in shape))


def mlp_forward(x, params, tile_cols=TILE_COLS):
    """x: any shape whose total size is divisible by 5 (PyTorch: x.view(-1, 5))."""
    x2d = jnp.reshape(x, (-1, IN_FEATURES)).astype(jnp.float32)
    n = x2d.shape[0]

    # Pad the batch to a multiple of the tile (and hence of 128 lanes), then
    # go feature-major so the batch maps to lanes.
    num_tiles = pl.cdiv(n, tile_cols)
    n_pad = num_tiles * tile_cols
    x2d_p = jnp.pad(x2d, ((0, n_pad - n), (0, 0)))
    xt = x2d_p.T                                                # (5, n_pad)

    (w1, b1), (w2, b2), (w3, b3), (w4, b4), (w5, b5) = params
    weight_args = (w1, b1, w2, b2, w3, b3, w4, b4, w5, b5)

    out_t = pl.pallas_call(
        _mlp_kernel,
        out_shape=jax.ShapeDtypeStruct((OUT_FEATURES, n_pad), jnp.float32),
        grid=(num_tiles,),
        in_specs=[pl.BlockSpec((IN_FEATURES, tile_cols), lambda i: (0, i))]
                 + [_resident_spec(a.shape) for a in weight_args],
        out_specs=pl.BlockSpec((OUT_FEATURES, tile_cols), lambda i: (0, i)),
        compiler_params=pltpu.CompilerParams(
            dimension_semantics=("parallel",),
            vmem_limit_bytes=32 * 1024 * 1024,
        ),
    )(xt, *weight_args)

    # Back to row-major (N, 2) and drop padding.
    return out_t[:, :n].T


def init_params(key):
    """Deterministic init mirroring nn.Linear's U(-1/sqrt(fan_in), 1/sqrt(fan_in)).

    Weights are stored PyTorch-style as (out_features, in_features); biases as
    (out_features, 1) so they broadcast across lanes inside the kernel.
    """
    sizes = [(IN_FEATURES, HIDDEN), (HIDDEN, HIDDEN), (HIDDEN, HIDDEN),
             (HIDDEN, HIDDEN), (HIDDEN, OUT_FEATURES)]
    params = []
    for fan_in, fan_out in sizes:
        key, kw, kb = jax.random.split(key, 3)
        bound = 1.0 / jnp.sqrt(jnp.float32(fan_in))
        w = jax.random.uniform(kw, (fan_out, fan_in), jnp.float32, -bound, bound)
        b = jax.random.uniform(kb, (fan_out, 1), jnp.float32, -bound, bound)
        params.append((w, b))
    return params


def reference_forward(x, params):
    """Plain-JAX reference for a sanity check."""
    h = jnp.reshape(x, (-1, IN_FEATURES)).astype(jnp.float32)
    for i, (w, b) in enumerate(params):
        h = h @ w.T + b.T
        if i < len(params) - 1:
            h = jnp.tanh(h)
    return h


if __name__ == "__main__":
    key = jax.random.PRNGKey(0)
    key, kx = jax.random.split(key)

    # Small example input: batch=2, seq=4, features=5  ->  flattened to (8, 5).
    x = jax.random.normal(kx, (2, 4, IN_FEATURES), dtype=jnp.float32)

    params = init_params(key)

    out = mlp_forward(x, params)
    out = jax.block_until_ready(out)

    ref = reference_forward(x, params)
    assert out.shape == (8, OUT_FEATURES), out.shape
    assert jnp.allclose(out, ref, atol=1e-5, rtol=1e-5), "mismatch vs reference"

    print("KERNEL_OK")
</pallas_src>

<mosaic_0001>
module attributes {stable_mosaic.version = 11 : i64} {
  func.func @_mlp_kernel(%arg0: i32, %arg1: memref<5x1024xf32, #tpu.memory_space<vmem>>, %arg2: memref<32x5xf32, #tpu.memory_space<vmem>>, %arg3: memref<32x1xf32, #tpu.memory_space<vmem>>, %arg4: memref<32x32xf32, #tpu.memory_space<vmem>>, %arg5: memref<32x1xf32, #tpu.memory_space<vmem>>, %arg6: memref<32x32xf32, #tpu.memory_space<vmem>>, %arg7: memref<32x1xf32, #tpu.memory_space<vmem>>, %arg8: memref<32x32xf32, #tpu.memory_space<vmem>>, %arg9: memref<32x1xf32, #tpu.memory_space<vmem>>, %arg10: memref<2x32xf32, #tpu.memory_space<vmem>>, %arg11: memref<2x1xf32, #tpu.memory_space<vmem>>, %arg12: memref<2x1024xf32, #tpu.memory_space<vmem>>) attributes {dimension_semantics = [#tpu.dimension_semantics<parallel>], iteration_bounds = array<i64: 1>, scalar_prefetch = 0 : i64, scratch_operands = 0 : i64, tpu.core_type = #tpu.core_type<tc>, window_params = [{transform_indices = @transform_0, window_bounds = array<i64: 5, 1024>}, {pipeline_mode = #tpu.pipeline_mode<synchronous>, transform_indices = @transform_1, window_bounds = array<i64: 32, 5>}, {pipeline_mode = #tpu.pipeline_mode<synchronous>, transform_indices = @transform_2, window_bounds = array<i64: 32, 1>}, {pipeline_mode = #tpu.pipeline_mode<synchronous>, transform_indices = @transform_3, window_bounds = array<i64: 32, 32>}, {pipeline_mode = #tpu.pipeline_mode<synchronous>, transform_indices = @transform_4, window_bounds = array<i64: 32, 1>}, {pipeline_mode = #tpu.pipeline_mode<synchronous>, transform_indices = @transform_5, window_bounds = array<i64: 32, 32>}, {pipeline_mode = #tpu.pipeline_mode<synchronous>, transform_indices = @transform_6, window_bounds = array<i64: 32, 1>}, {pipeline_mode = #tpu.pipeline_mode<synchronous>, transform_indices = @transform_7, window_bounds = array<i64: 32, 32>}, {pipeline_mode = #tpu.pipeline_mode<synchronous>, transform_indices = @transform_8, window_bounds = array<i64: 32, 1>}, {pipeline_mode = #tpu.pipeline_mode<synchronous>, transform_indices = @transform_9, window_bounds = array<i64: 2, 32>}, {pipeline_mode = #tpu.pipeline_mode<synchronous>, transform_indices = @transform_10, window_bounds = array<i64: 2, 1>}, {transform_indices = @transform_11, window_bounds = array<i64: 2, 1024>}]} {
    %c0 = arith.constant 0 : index
    %c0_0 = arith.constant 0 : index
    %0 = vector.load %arg1[%c0, %c0_0] : memref<5x1024xf32, #tpu.memory_space<vmem>>, vector<5x1024xf32>
    %c0_1 = arith.constant 0 : index
    %c0_2 = arith.constant 0 : index
    %1 = vector.load %arg2[%c0_1, %c0_2] : memref<32x5xf32, #tpu.memory_space<vmem>>, vector<32x5xf32>
    %cst = arith.constant dense<0.000000e+00> : vector<32x1024xf32>
    %2 = tpu.matmul %1, %0, %cst {dimension_numbers = #tpu.dot_dimension_numbers<[1], [0], [0], [1], [0, 0, 1, 1], [], []>} : vector<32x5xf32>, vector<5x1024xf32>, vector<32x1024xf32> -> vector<32x1024xf32>
    %c0_3 = arith.constant 0 : index
    %c0_4 = arith.constant 0 : index
    %3 = vector.load %arg3[%c0_3, %c0_4] : memref<32x1xf32, #tpu.memory_space<vmem>>, vector<32x1xf32>
    %4 = vector.broadcast %3 : vector<32x1xf32> to vector<32x1024xf32>
    %5 = arith.addf %2, %4 : vector<32x1024xf32>
    %6 = math.tanh %5 : vector<32x1024xf32>
    %c0_5 = arith.constant 0 : index
    %c0_6 = arith.constant 0 : index
    %7 = vector.load %arg4[%c0_5, %c0_6] : memref<32x32xf32, #tpu.memory_space<vmem>>, vector<32x32xf32>
    %cst_7 = arith.constant dense<0.000000e+00> : vector<32x1024xf32>
    %8 = tpu.matmul %7, %6, %cst_7 {dimension_numbers = #tpu.dot_dimension_numbers<[1], [0], [0], [1], [0, 0, 1, 1], [], []>} : vector<32x32xf32>, vector<32x1024xf32>, vector<32x1024xf32> -> vector<32x1024xf32>
    %c0_8 = arith.constant 0 : index
    %c0_9 = arith.constant 0 : index
    %9 = vector.load %arg5[%c0_8, %c0_9] : memref<32x1xf32, #tpu.memory_space<vmem>>, vector<32x1xf32>
    %10 = vector.broadcast %9 : vector<32x1xf32> to vector<32x1024xf32>
    %11 = arith.addf %8, %10 : vector<32x1024xf32>
    %12 = math.tanh %11 : vector<32x1024xf32>
    %c0_10 = arith.constant 0 : index
    %c0_11 = arith.constant 0 : index
    %13 = vector.load %arg6[%c0_10, %c0_11] : memref<32x32xf32, #tpu.memory_space<vmem>>, vector<32x32xf32>
    %cst_12 = arith.constant dense<0.000000e+00> : vector<32x1024xf32>
    %14 = tpu.matmul %13, %12, %cst_12 {dimension_numbers = #tpu.dot_dimension_numbers<[1], [0], [0], [1], [0, 0, 1, 1], [], []>} : vector<32x32xf32>, vector<32x1024xf32>, vector<32x1024xf32> -> vector<32x1024xf32>
    %c0_13 = arith.constant 0 : index
    %c0_14 = arith.constant 0 : index
    %15 = vector.load %arg7[%c0_13, %c0_14] : memref<32x1xf32, #tpu.memory_space<vmem>>, vector<32x1xf32>
    %16 = vector.broadcast %15 : vector<32x1xf32> to vector<32x1024xf32>
    %17 = arith.addf %14, %16 : vector<32x1024xf32>
    %18 = math.tanh %17 : vector<32x1024xf32>
    %c0_15 = arith.constant 0 : index
    %c0_16 = arith.constant 0 : index
    %19 = vector.load %arg8[%c0_15, %c0_16] : memref<32x32xf32, #tpu.memory_space<vmem>>, vector<32x32xf32>
    %cst_17 = arith.constant dense<0.000000e+00> : vector<32x1024xf32>
    %20 = tpu.matmul %19, %18, %cst_17 {dimension_numbers = #tpu.dot_dimension_numbers<[1], [0], [0], [1], [0, 0, 1, 1], [], []>} : vector<32x32xf32>, vector<32x1024xf32>, vector<32x1024xf32> -> vector<32x1024xf32>
    %c0_18 = arith.constant 0 : index
    %c0_19 = arith.constant 0 : index
    %21 = vector.load %arg9[%c0_18, %c0_19] : memref<32x1xf32, #tpu.memory_space<vmem>>, vector<32x1xf32>
    %22 = vector.broadcast %21 : vector<32x1xf32> to vector<32x1024xf32>
    %23 = arith.addf %20, %22 : vector<32x1024xf32>
    %24 = math.tanh %23 : vector<32x1024xf32>
    %c0_20 = arith.constant 0 : index
    %c0_21 = arith.constant 0 : index
    %25 = vector.load %arg10[%c0_20, %c0_21] : memref<2x32xf32, #tpu.memory_space<vmem>>, vector<2x32xf32>
    %cst_22 = arith.constant dense<0.000000e+00> : vector<2x1024xf32>
    %26 = tpu.matmul %25, %24, %cst_22 {dimension_numbers = #tpu.dot_dimension_numbers<[1], [0], [0], [1], [0, 0, 1, 1], [], []>} : vector<2x32xf32>, vector<32x1024xf32>, vector<2x1024xf32> -> vector<2x1024xf32>
    %c0_23 = arith.constant 0 : index
    %c0_24 = arith.constant 0 : index
    %27 = vector.load %arg11[%c0_23, %c0_24] : memref<2x1xf32, #tpu.memory_space<vmem>>, vector<2x1xf32>
    %28 = vector.broadcast %27 : vector<2x1xf32> to vector<2x1024xf32>
    %29 = arith.addf %26, %28 : vector<2x1024xf32>
    %c0_25 = arith.constant 0 : index
    %c0_26 = arith.constant 0 : index
    %30 = vector.load %arg12[%c0_25, %c0_26] : memref<2x1024xf32, #tpu.memory_space<vmem>>, vector<2x1024xf32>
    tpu.vector_store %arg12[%c0_25, %c0_26], %29 {strides = array<i32>} : memref<2x1024xf32, #tpu.memory_space<vmem>>, vector<2x1024xf32>,
    return
  }
  func.func @transform_0(%arg0: i32) -> (i32, i32) {
    %c0_i32 = arith.constant 0 : i32
    %c0_i32_0 = arith.constant 0 : i32
    return %c0_i32, %arg0 : i32, i32
  }
  func.func @transform_1(%arg0: i32) -> (i32, i32) {
    %c0_i32 = arith.constant 0 : i32
    %c0_i32_0 = arith.constant 0 : i32
    %c0_i32_1 = arith.constant 0 : i32
    return %c0_i32, %c0_i32_0 : i32, i32
  }
  func.func @transform_2(%arg0: i32) -> (i32, i32) {
    %c0_i32 = arith.constant 0 : i32
    %c0_i32_0 = arith.constant 0 : i32
    %c0_i32_1 = arith.constant 0 : i32
    return %c0_i32, %c0_i32_0 : i32, i32
  }
  func.func @transform_3(%arg0: i32) -> (i32, i32) {
    %c0_i32 = arith.constant 0 : i32
    %c0_i32_0 = arith.constant 0 : i32
    %c0_i32_1 = arith.constant 0 : i32
    return %c0_i32, %c0_i32_0 : i32, i32
  }
  func.func @transform_4(%arg0: i32) -> (i32, i32) {
    %c0_i32 = arith.constant 0 : i32
    %c0_i32_0 = arith.constant 0 : i32
    %c0_i32_1 = arith.constant 0 : i32
    return %c0_i32, %c0_i32_0 : i32, i32
  }
  func.func @transform_5(%arg0: i32) -> (i32, i32) {
    %c0_i32 = arith.constant 0 : i32
    %c0_i32_0 = arith.constant 0 : i32
    %c0_i32_1 = arith.constant 0 : i32
    return %c0_i32, %c0_i32_0 : i32, i32
  }
  func.func @transform_6(%arg0: i32) -> (i32, i32) {
    %c0_i32 = arith.constant 0 : i32
    %c0_i32_0 = arith.constant 0 : i32
    %c0_i32_1 = arith.constant 0 : i32
    return %c0_i32, %c0_i32_0 : i32, i32
  }
  func.func @transform_7(%arg0: i32) -> (i32, i32) {
    %c0_i32 = arith.constant 0 : i32
    %c0_i32_0 = arith.constant 0 : i32
    %c0_i32_1 = arith.constant 0 : i32
    return %c0_i32, %c0_i32_0 : i32, i32
  }
  func.func @transform_8(%arg0: i32) -> (i32, i32) {
    %c0_i32 = arith.constant 0 : i32
    %c0_i32_0 = arith.constant 0 : i32
    %c0_i32_1 = arith.constant 0 : i32
    return %c0_i32, %c0_i32_0 : i32, i32
  }
  func.func @transform_9(%arg0: i32) -> (i32, i32) {
    %c0_i32 = arith.constant 0 : i32
    %c0_i32_0 = arith.constant 0 : i32
    %c0_i32_1 = arith.constant 0 : i32
    return %c0_i32, %c0_i32_0 : i32, i32
  }
  func.func @transform_10(%arg0: i32) -> (i32, i32) {
    %c0_i32 = arith.constant 0 : i32
    %c0_i32_0 = arith.constant 0 : i32
    %c0_i32_1 = arith.constant 0 : i32
    return %c0_i32, %c0_i32_0 : i32, i32
  }
  func.func @transform_11(%arg0: i32) -> (i32, i32) {
    %c0_i32 = arith.constant 0 : i32
    %c0_i32_0 = arith.constant 0 : i32
    return %c0_i32, %arg0 : i32, i32
  }
}

</mosaic_0001>

<llo_original>
// kernel: tpu_custom_call.1
$region0: #{tpu_custom_call.1}
  #allocation0 [shape = 'u32[]', space=smem, size = 0x4, offset = 0x4, fixed_abs, tag = 'smem constant byte address 0x4 - core index']
  #allocation1 [shape = 'u32[144,128]{1,0:T(1,128)}', space=vmem, size = 0x12000, scoped, tag = 'internal scratch']
  %s0 = inlined_call_operand.vmem [shape: f32[5,1024], index: 0, kind: input, shape index: {}]
  %s1 = inlined_call_operand.vmem [shape: f32[32,5], index: 1, kind: input, shape index: {}]
  %s2 = inlined_call_operand.vmem [shape: f32[32,1], index: 2, kind: input, shape index: {}]
  %s3 = inlined_call_operand.vmem [shape: f32[32,32], index: 3, kind: input, shape index: {}]
  %s4 = inlined_call_operand.vmem [shape: f32[32,1], index: 4, kind: input, shape index: {}]
  %s5 = inlined_call_operand.vmem [shape: f32[32,32], index: 5, kind: input, shape index: {}]
  %s6 = inlined_call_operand.vmem [shape: f32[32,1], index: 6, kind: input, shape index: {}]
  %s7 = inlined_call_operand.vmem [shape: f32[32,32], index: 7, kind: input, shape index: {}]
  %s8 = inlined_call_operand.vmem [shape: f32[32,1], index: 8, kind: input, shape index: {}]
  %s9 = inlined_call_operand.vmem [shape: f32[2,32], index: 9, kind: input, shape index: {}]
  %s10 = inlined_call_operand.vmem [shape: f32[2,1], index: 10, kind: input, shape index: {}]
  %s11 = inlined_call_operand.hbm [shape: f32[2,1024], index: 11, kind: output, shape index: {}]
  %s12 = sld [smem:[#allocation0]]
  $region54: #{tpu_custom_call.1} parent=0
    _
  %s14 = ssub.s32 1, %s12
  %s15 = scalar_select 0, %s14, %s12
  $region1: #{tpu_custom_call.1} parent=0
    #allocation2 [shape = 'u8[8192]{0}', space=vmem, size = 0x2000, scoped, tag = 'output window, operand 0, single buffered']
    #allocation3 [shape = 's32[1]{0}', space=sflag, size = 0x4, scoped, tag = 'scoped memory for tpu_custom_call.1']
    %16 = vsyncpa [#allocation3], 0
    // Predicated region
    $region2: #{tpu_custom_call.1} parent=1 // pred_check
      _
    $region3: #{tpu_custom_call.1} parent=1 // pred_check_branch
      %18 = sbr.rel (0) target = $region5
    $region4: #{tpu_custom_call.1} parent=1 // pred_region
      _
    $region5: #{tpu_custom_call.1} parent=1 // pred_fallthru
      _
    // Predicated region
    $region6: #{tpu_custom_call.1} parent=1 // pred_check
      _
    $region7: #{tpu_custom_call.1} parent=1 // pred_check_branch
      %20 = sbr.rel (0) target = $region9
    $region8: #{tpu_custom_call.1} parent=1 // pred_region
      _
    $region9: #{tpu_custom_call.1} parent=1 // pred_fallthru
      _
    // Predicated region
    $region10: #{tpu_custom_call.1} parent=1 // pred_check
      _
    $region11: #{tpu_custom_call.1} parent=1 // pred_check_branch
      %22 = sbr.rel (0) target = $region13
    $region12: #{tpu_custom_call.1} parent=1 // pred_region
      _
    $region13: #{tpu_custom_call.1} parent=1 // pred_fallthru
      _
    // Predicated region
    $region14: #{tpu_custom_call.1} parent=1 // pred_check
      _
    $region15: #{tpu_custom_call.1} parent=1 // pred_check_branch
      %24 = sbr.rel (0) target = $region17
    $region16: #{tpu_custom_call.1} parent=1 // pred_region
      _
    $region17: #{tpu_custom_call.1} parent=1 // pred_fallthru
      _
    // Predicated region
    $region18: #{tpu_custom_call.1} parent=1 // pred_check
      _
    $region19: #{tpu_custom_call.1} parent=1 // pred_check_branch
      %26 = sbr.rel (0) target = $region21
    $region20: #{tpu_custom_call.1} parent=1 // pred_region
      _
    $region21: #{tpu_custom_call.1} parent=1 // pred_fallthru
      _
    // Predicated region
    $region22: #{tpu_custom_call.1} parent=1 // pred_check
      _
    $region23: #{tpu_custom_call.1} parent=1 // pred_check_branch
      %28 = sbr.rel (0) target = $region25
    $region24: #{tpu_custom_call.1} parent=1 // pred_region
      _
    $region25: #{tpu_custom_call.1} parent=1 // pred_fallthru
      _
    // Predicated region
    $region26: #{tpu_custom_call.1} parent=1 // pred_check
      _
    $region27: #{tpu_custom_call.1} parent=1 // pred_check_branch
      %30 = sbr.rel (0) target = $region29
    $region28: #{tpu_custom_call.1} parent=1 // pred_region
      _
    $region29: #{tpu_custom_call.1} parent=1 // pred_fallthru
      _
    // Predicated region
    $region30: #{tpu_custom_call.1} parent=1 // pred_check
      _
    $region31: #{tpu_custom_call.1} parent=1 // pred_check_branch
      %32 = sbr.rel (0) target = $region33
    $region32: #{tpu_custom_call.1} parent=1 // pred_region
      _
    $region33: #{tpu_custom_call.1} parent=1 // pred_fallthru
      _
    // Predicated region
    $region34: #{tpu_custom_call.1} parent=1 // pred_check
      _
    $region35: #{tpu_custom_call.1} parent=1 // pred_check_branch
      %34 = sbr.rel (0) target = $region37
    $region36: #{tpu_custom_call.1} parent=1 // pred_region
      _
    $region37: #{tpu_custom_call.1} parent=1 // pred_fallthru
      _
    // Predicated region
    $region38: #{tpu_custom_call.1} parent=1 // pred_check
      _
    $region39: #{tpu_custom_call.1} parent=1 // pred_check_branch
      %36 = sbr.rel (0) target = $region41
    $region40: #{tpu_custom_call.1} parent=1 // pred_region
      _
    $region41: #{tpu_custom_call.1} parent=1 // pred_fallthru
      _
    // Predicated region
    $region42: #{tpu_custom_call.1} parent=1 // pred_check
      _
    $region43: #{tpu_custom_call.1} parent=1 // pred_check_branch
      %38 = sbr.rel (0) target = $region45
    $region44: #{tpu_custom_call.1} parent=1 // pred_region
      _
    $region45: #{tpu_custom_call.1} parent=1 // pred_fallthru
      _
    %v39 = vld [vmem:[%s0] sm:$0x1f]
    %v40 = vld [vmem:[%s0 + $0x8] sm:$0x1f]
    %v41 = vld [vmem:[%s0 + $0x10] sm:$0x1f]
    %v42 = vld [vmem:[%s0 + $0x18] sm:$0x1f]
    %v43 = vld [vmem:[%s0 + $0x20] sm:$0x1f]
    %v44 = vld [vmem:[%s0 + $0x28] sm:$0x1f]
    %v45 = vld [vmem:[%s0 + $0x30] sm:$0x1f]
    %v46 = vld [vmem:[%s0 + $0x38] sm:$0x1f]
    %v47 = vld [vmem:[%s1] sm:$0xff]
    %v48 = vld [vmem:[%s1 + $0x8] sm:$0xff]
    %v49 = vld [vmem:[%s1 + $0x10] sm:$0xff]
    %v50 = vld [vmem:[%s1 + $0x18] sm:$0xff]
    %v51 = vld [vmem:[%s2] sm:$0xff]
    %v52 = vld [vmem:[%s2 + $0x8] sm:$0xff]
    %v53 = vld [vmem:[%s2 + $0x10] sm:$0xff]
    %v54 = vld [vmem:[%s2 + $0x18] sm:$0xff]
    %56 = vset.pattern.permute.xlu0 0
    %57 = vperm.xlu0 %56, %v51
    %v58 = vpop.permute.xlu0 %57
    %61 = vset.pattern.permute.xlu0 0
    %62 = vperm.xlu0 %61, %v52
    %v63 = vpop.permute.xlu0 %62
    %66 = vset.pattern.permute.xlu0 0
    %67 = vperm.xlu0 %66, %v53
    %v68 = vpop.permute.xlu0 %67
    %71 = vset.pattern.permute.xlu0 0
    %72 = vperm.xlu0 %71, %v54
    %v73 = vpop.permute.xlu0 %72
    %vm75 = vcmask 39936
    %v77 = vsel %vm75, %v47, 0
    %v80 = vsel %vm75, %v48, 0
    %v83 = vsel %vm75, %v49, 0
    %v86 = vsel %vm75, %v50, 0
    %vm88 = vcmask 1044480
    %v90 = vsel %vm88, %v39, 0
    %v93 = vsel %vm88, %v40, 0
    %v96 = vsel %vm88, %v41, 0
    %v99 = vsel %vm88, %v42, 0
    %v102 = vsel %vm88, %v43, 0
    %v105 = vsel %vm88, %v44, 0
    %v108 = vsel %vm88, %v45, 0
    %v111 = vsel %vm88, %v46, 0
    %113 = vmatprep.subr.mxu0 0.0
    %114 = vmatpush1.msra.mxu0 0.0
    %115 = vmatprep.subr.mxu0 0.0
    %116 = vmatpush1.msra.mxu0 0.0
    %117 = vmatprep.subr.mxu0 0.0
    %118 = vmatpush1.msra.mxu0 0.0
    %119 = vmatprep.subr.mxu0 0.0
    %120 = vmatpush1.msra.mxu0 0.0
    %121 = vmatprep.subr.mxu0 0.0
    %122 = vmatpush1.msra.mxu0 0.0
    %123 = vmatprep.subr.mxu0 0.0
    %124 = vmatpush1.msra.mxu0 0.0
    %125 = vmatprep.subr.mxu0 0.0
    %126 = vmatpush1.msra.mxu0 0.0
    %127 = vmatprep.subr.mxu0 0.0
    %128 = vmatpush1.msra.mxu0 0.0
    %129 = vmatprep.subr.mxu0 0.0
    %130 = vmatpush1.msra.mxu0 0.0
    %131 = vmatprep.subr.mxu0 0.0
    %132 = vmatpush1.msra.mxu0 0.0
    %133 = vmatprep.subr.mxu0 0.0
    %134 = vmatpush1.msra.mxu0 0.0
    %135 = vmatprep.subr.mxu0 0.0
    %136 = vmatpush1.msra.mxu0 0.0
    %137 = vmatprep.subr.mxu0 0.0
    %138 = vmatpush1.msra.mxu0 0.0
    %139 = vmatprep.subr.mxu0 0.0
    %140 = vmatpush1.msra.mxu0 0.0
    %141 = vmatprep.subr.mxu0 0.0
    %142 = vmatpush1.msra.mxu0 0.0
    %143 = vmatprep.subr.mxu0 %v93
    %144 = vmatpush1.msra.mxu0 %v90
    %145 = vmatprep.subr.mxu0 0.0
    %146 = vmatpush2.msra.mxu0 0.0
    %147 = vmatprep.subr.mxu0 0.0
    %148 = vmatpush2.msra.mxu0 0.0
    %149 = vmatprep.subr.mxu0 0.0
    %150 = vmatpush2.msra.mxu0 0.0
    %151 = vmatprep.subr.mxu0 0.0
    %152 = vmatpush2.msra.mxu0 0.0
    %153 = vmatprep.subr.mxu0 0.0
    %154 = vmatpush2.msra.mxu0 0.0
    %155 = vmatprep.subr.mxu0 0.0
    %156 = vmatpush2.msra.mxu0 0.0
    %157 = vmatprep.subr.mxu0 0.0
    %158 = vmatpush2.msra.mxu0 0.0
    %159 = vmatprep.subr.mxu0 0.0
    %160 = vmatpush2.msra.mxu0 0.0
    %161 = vmatprep.subr.mxu0 0.0
    %162 = vmatpush2.msra.mxu0 0.0
    %163 = vmatprep.subr.mxu0 0.0
    %164 = vmatpush2.msra.mxu0 0.0
    %165 = vmatprep.subr.mxu0 0.0
    %166 = vmatpush2.msra.mxu0 0.0
    %167 = vmatprep.subr.mxu0 0.0
    %168 = vmatpush2.msra.mxu0 0.0
    %169 = vmatprep.subr.mxu0 0.0
    %170 = vmatpush2.msra.mxu0 0.0
    %171 = vmatprep.subr.mxu0 0.0
    %172 = vmatpush2.msra.mxu0 0.0
    %173 = vmatprep.subr.mxu0 0.0
    %174 = vmatpush2.msra.mxu0 0.0
    %175 = vmatprep.subr.mxu0 0.0
    %176 = vmatpush2.msra.mxu0 0.0
    %177 = vmatprep.mubr.f32.mxu0 0.0
    %178 = vmatmul.mubr.f32.gmra.mxu0 %v77
    %v179 = vpop.f32.mrf.mxu0
    %v180 = vadd.f32 %v58, %v179
    %v181 = vpop.f32.mrf.mxu0
    %v182 = vadd.f32 %v58, %v181
    %183 = vmatprep.mubr.f32.mxu0 0.0
    %184 = vmatmul.mubr.f32.gmra.mxu0 %v80
    %v185 = vpop.f32.mrf.mxu0
    %v186 = vadd.f32 %v63, %v185
    %v187 = vpop.f32.mrf.mxu0
    %v188 = vadd.f32 %v63, %v187
    %189 = vmatprep.mubr.f32.mxu0 0.0
    %190 = vmatmul.mubr.f32.gmra.mxu0 %v83
    %v191 = vpop.f32.mrf.mxu0
    %v192 = vadd.f32 %v68, %v191
    %v193 = vpop.f32.mrf.mxu0
    %v194 = vadd.f32 %v68, %v193
    %195 = vmatprep.mubr.f32.mxu0 0.0
    %196 = vmatmul.mubr.f32.gmra.mxu0 %v86
    %v197 = vpop.f32.mrf.mxu0
    %v198 = vadd.f32 %v73, %v197
    %v199 = vpop.f32.mrf.mxu0
    %v200 = vadd.f32 %v73, %v199
    %201 = vdwg.mxu0
    %202 = vmatprep.subr.mxu0 0.0
    %203 = vmatpush1.msra.mxu0 0.0
    %204 = vmatprep.subr.mxu0 0.0
    %205 = vmatpush1.msra.mxu0 0.0
    %206 = vmatprep.subr.mxu0 0.0
    %207 = vmatpush1.msra.mxu0 0.0
    %208 = vmatprep.subr.mxu0 0.0
    %209 = vmatpush1.msra.mxu0 0.0
    %210 = vmatprep.subr.mxu0 0.0
    %211 = vmatpush1.msra.mxu0 0.0
    %212 = vmatprep.subr.mxu0 0.0
    %213 = vmatpush1.msra.mxu0 0.0
    %214 = vmatprep.subr.mxu0 0.0
    %215 = vmatpush1.msra.mxu0 0.0
    %216 = vmatprep.subr.mxu0 0.0
    %217 = vmatpush1.msra.mxu0 0.0
    %218 = vmatprep.subr.mxu0 0.0
    %219 = vmatpush1.msra.mxu0 0.0
    %220 = vmatprep.subr.mxu0 0.0
    %221 = vmatpush1.msra.mxu0 0.0
    %222 = vmatprep.subr.mxu0 0.0
    %223 = vmatpush1.msra.mxu0 0.0
    %224 = vmatprep.subr.mxu0 0.0
    %225 = vmatpush1.msra.mxu0 0.0
    %226 = vmatprep.subr.mxu0 0.0
    %227 = vmatpush1.msra.mxu0 0.0
    %228 = vmatprep.subr.mxu0 0.0
    %229 = vmatpush1.msra.mxu0 0.0
    %230 = vmatprep.subr.mxu0 0.0
    %231 = vmatpush1.msra.mxu0 0.0
    %232 = vmatprep.subr.mxu0 %v99
    %233 = vmatpush1.msra.mxu0 %v96
    %234 = vmatprep.subr.mxu0 0.0
    %235 = vmatpush2.msra.mxu0 0.0
    %236 = vmatprep.subr.mxu0 0.0
    %237 = vmatpush2.msra.mxu0 0.0
    %238 = vmatprep.subr.mxu0 0.0
    %239 = vmatpush2.msra.mxu0 0.0
    %240 = vmatprep.subr.mxu0 0.0
    %241 = vmatpush2.msra.mxu0 0.0
    %242 = vmatprep.subr.mxu0 0.0
    %243 = vmatpush2.msra.mxu0 0.0
    %244 = vmatprep.subr.mxu0 0.0
    %245 = vmatpush2.msra.mxu0 0.0
    %246 = vmatprep.subr.mxu0 0.0
    %247 = vmatpush2.msra.mxu0 0.0
    %248 = vmatprep.subr.mxu0 0.0
    %249 = vmatpush2.msra.mxu0 0.0
    %250 = vmatprep.subr.mxu0 0.0
    %251 = vmatpush2.msra.mxu0 0.0
    %252 = vmatprep.subr.mxu0 0.0
    %253 = vmatpush2.msra.mxu0 0.0
    %254 = vmatprep.subr.mxu0 0.0
    %255 = vmatpush2.msra.mxu0 0.0
    %256 = vmatprep.subr.mxu0 0.0
    %257 = vmatpush2.msra.mxu0 0.0
    %258 = vmatprep.subr.mxu0 0.0
    %259 = vmatpush2.msra.mxu0 0.0
    %260 = vmatprep.subr.mxu0 0.0
    %261 = vmatpush2.msra.mxu0 0.0
    %262 = vmatprep.subr.mxu0 0.0
    %263 = vmatpush2.msra.mxu0 0.0
    %264 = vmatprep.subr.mxu0 0.0
    %265 = vmatpush2.msra.mxu0 0.0
    %266 = vmatprep.mubr.f32.mxu0 0.0
    %267 = vmatmul.mubr.f32.gmra.mxu0 %v77
    %v268 = vpop.f32.mrf.mxu0
    %v269 = vadd.f32 %v58, %v268
    %v270 = vpop.f32.mrf.mxu0
    %v271 = vadd.f32 %v58, %v270
    %272 = vmatprep.mubr.f32.mxu0 0.0
    %273 = vmatmul.mubr.f32.gmra.mxu0 %v80
    %v274 = vpop.f32.mrf.mxu0
    %v275 = vadd.f32 %v63, %v274
    %v276 = vpop.f32.mrf.mxu0
    %v277 = vadd.f32 %v63, %v276
    %278 = vmatprep.mubr.f32.mxu0 0.0
    %279 = vmatmul.mubr.f32.gmra.mxu0 %v83
    %v280 = vpop.f32.mrf.mxu0
    %v281 = vadd.f32 %v68, %v280
    %v282 = vpop.f32.mrf.mxu0
    %v283 = vadd.f32 %v68, %v282
    %284 = vmatprep.mubr.f32.mxu0 0.0
    %285 = vmatmul.mubr.f32.gmra.mxu0 %v86
    %v286 = vpop.f32.mrf.mxu0
    %v287 = vadd.f32 %v73, %v286
    %v288 = vpop.f32.mrf.mxu0
    %v289 = vadd.f32 %v73, %v288
    %290 = vdwg.mxu0
    %291 = vmatprep.subr.mxu0 0.0
    %292 = vmatpush1.msra.mxu0 0.0
    %293 = vmatprep.subr.mxu0 0.0
    %294 = vmatpush1.msra.mxu0 0.0
    %295 = vmatprep.subr.mxu0 0.0
    %296 = vmatpush1.msra.mxu0 0.0
    %297 = vmatprep.subr.mxu0 0.0
    %298 = vmatpush1.msra.mxu0 0.0
    %299 = vmatprep.subr.mxu0 0.0
    %300 = vmatpush1.msra.mxu0 0.0
    %301 = vmatprep.subr.mxu0 0.0
    %302 = vmatpush1.msra.mxu0 0.0
    %303 = vmatprep.subr.mxu0 0.0
    %304 = vmatpush1.msra.mxu0 0.0
    %305 = vmatprep.subr.mxu0 0.0
    %306 = vmatpush1.msra.mxu0 0.0
    %307 = vmatprep.subr.mxu0 0.0
    %308 = vmatpush1.msra.mxu0 0.0
    %309 = vmatprep.subr.mxu0 0.0
    %310 = vmatpush1.msra.mxu0 0.0
    %311 = vmatprep.subr.mxu0 0.0
    %312 = vmatpush1.msra.mxu0 0.0
    %313 = vmatprep.subr.mxu0 0.0
    %314 = vmatpush1.msra.mxu0 0.0
    %315 = vmatprep.subr.mxu0 0.0
    %316 = vmatpush1.msra.mxu0 0.0
    %317 = vmatprep.subr.mxu0 0.0
    %318 = vmatpush1.msra.mxu0 0.0
    %319 = vmatprep.subr.mxu0 0.0
    %320 = vmatpush1.msra.mxu0 0.0
    %321 = vmatprep.subr.mxu0 %v105
    %322 = vmatpush1.msra.mxu0 %v102
    %323 = vmatprep.subr.mxu0 0.0
    %324 = vmatpush2.msra.mxu0 0.0
    %325 = vmatprep.subr.mxu0 0.0
    %326 = vmatpush2.msra.mxu0 0.0
    %327 = vmatprep.subr.mxu0 0.0
    %328 = vmatpush2.msra.mxu0 0.0
    %329 = vmatprep.subr.mxu0 0.0
    %330 = vmatpush2.msra.mxu0 0.0
    %331 = vmatprep.subr.mxu0 0.0
    %332 = vmatpush2.msra.mxu0 0.0
    %333 = vmatprep.subr.mxu0 0.0
    %334 = vmatpush2.msra.mxu0 0.0
    %335 = vmatprep.subr.mxu0 0.0
    %336 = vmatpush2.msra.mxu0 0.0
    %337 = vmatprep.subr.mxu0 0.0
    %338 = vmatpush2.msra.mxu0 0.0
    %339 = vmatprep.subr.mxu0 0.0
    %340 = vmatpush2.msra.mxu0 0.0
    %341 = vmatprep.subr.mxu0 0.0
    %342 = vmatpush2.msra.mxu0 0.0
    %343 = vmatprep.subr.mxu0 0.0
    %344 = vmatpush2.msra.mxu0 0.0
    %345 = vmatprep.subr.mxu0 0.0
    %346 = vmatpush2.msra.mxu0 0.0
    %347 = vmatprep.subr.mxu0 0.0
    %348 = vmatpush2.msra.mxu0 0.0
    %349 = vmatprep.subr.mxu0 0.0
    %350 = vmatpush2.msra.mxu0 0.0
    %351 = vmatprep.subr.mxu0 0.0
    %352 = vmatpush2.msra.mxu0 0.0
    %353 = vmatprep.subr.mxu0 0.0
    %354 = vmatpush2.msra.mxu0 0.0
    %355 = vmatprep.mubr.f32.mxu0 0.0
    %356 = vmatmul.mubr.f32.gmra.mxu0 %v77
    %v357 = vpop.f32.mrf.mxu0
    %v358 = vadd.f32 %v58, %v357
    %v359 = vpop.f32.mrf.mxu0
    %v360 = vadd.f32 %v58, %v359
    %361 = vmatprep.mubr.f32.mxu0 0.0
    %362 = vmatmul.mubr.f32.gmra.mxu0 %v80
    %v363 = vpop.f32.mrf.mxu0
    %v364 = vadd.f32 %v63, %v363
    %v365 = vpop.f32.mrf.mxu0
    %v366 = vadd.f32 %v63, %v365
    %367 = vmatprep.mubr.f32.mxu0 0.0
    %368 = vmatmul.mubr.f32.gmra.mxu0 %v83
    %v369 = vpop.f32.mrf.mxu0
    %v370 = vadd.f32 %v68, %v369
    %v371 = vpop.f32.mrf.mxu0
    %v372 = vadd.f32 %v68, %v371
    %373 = vmatprep.mubr.f32.mxu0 0.0
    %374 = vmatmul.mubr.f32.gmra.mxu0 %v86
    %v375 = vpop.f32.mrf.mxu0
    %v376 = vadd.f32 %v73, %v375
    %v377 = vpop.f32.mrf.mxu0
    %v378 = vadd.f32 %v73, %v377
    %379 = vdwg.mxu0
    %380 = vmatprep.subr.mxu0 0.0
    %381 = vmatpush1.msra.mxu0 0.0
    %382 = vmatprep.subr.mxu0 0.0
    %383 = vmatpush1.msra.mxu0 0.0
    %384 = vmatprep.subr.mxu0 0.0
    %385 = vmatpush1.msra.mxu0 0.0
    %386 = vmatprep.subr.mxu0 0.0
    %387 = vmatpush1.msra.mxu0 0.0
    %388 = vmatprep.subr.mxu0 0.0
    %389 = vmatpush1.msra.mxu0 0.0
    %390 = vmatprep.subr.mxu0 0.0
    %391 = vmatpush1.msra.mxu0 0.0
    %392 = vmatprep.subr.mxu0 0.0
    %393 = vmatpush1.msra.mxu0 0.0
    %394 = vmatprep.subr.mxu0 0.0
    %395 = vmatpush1.msra.mxu0 0.0
    %396 = vmatprep.subr.mxu0 0.0
    %397 = vmatpush1.msra.mxu0 0.0
    %398 = vmatprep.subr.mxu0 0.0
    %399 = vmatpush1.msra.mxu0 0.0
    %400 = vmatprep.subr.mxu0 0.0
    %401 = vmatpush1.msra.mxu0 0.0
    %402 = vmatprep.subr.mxu0 0.0
    %403 = vmatpush1.msra.mxu0 0.0
    %404 = vmatprep.subr.mxu0 0.0
    %405 = vmatpush1.msra.mxu0 0.0
    %406 = vmatprep.subr.mxu0 0.0
    %407 = vmatpush1.msra.mxu0 0.0
    %408 = vmatprep.subr.mxu0 0.0
    %409 = vmatpush1.msra.mxu0 0.0
    %410 = vmatprep.subr.mxu0 %v111
    %411 = vmatpush1.msra.mxu0 %v108
    %412 = vmatprep.subr.mxu0 0.0
    %413 = vmatpush2.msra.mxu0 0.0
    %414 = vmatprep.subr.mxu0 0.0
    %415 = vmatpush2.msra.mxu0 0.0
    %416 = vmatprep.subr.mxu0 0.0
    %417 = vmatpush2.msra.mxu0 0.0
    %418 = vmatprep.subr.mxu0 0.0
    %419 = vmatpush2.msra.mxu0 0.0
    %420 = vmatprep.subr.mxu0 0.0
    %421 = vmatpush2.msra.mxu0 0.0
    %422 = vmatprep.subr.mxu0 0.0
    %423 = vmatpush2.msra.mxu0 0.0
    %424 = vmatprep.subr.mxu0 0.0
    %425 = vmatpush2.msra.mxu0 0.0
    %426 = vmatprep.subr.mxu0 0.0
    %427 = vmatpush2.msra.mxu0 0.0
    %428 = vmatprep.subr.mxu0 0.0
    %429 = vmatpush2.msra.mxu0 0.0
    %430 = vmatprep.subr.mxu0 0.0
    %431 = vmatpush2.msra.mxu0 0.0
    %432 = vmatprep.subr.mxu0 0.0
    %433 = vmatpush2.msra.mxu0 0.0
    %434 = vmatprep.subr.mxu0 0.0
    %435 = vmatpush2.msra.mxu0 0.0
    %436 = vmatprep.subr.mxu0 0.0
    %437 = vmatpush2.msra.mxu0 0.0
    %438 = vmatprep.subr.mxu0 0.0
    %439 = vmatpush2.msra.mxu0 0.0
    %440 = vmatprep.subr.mxu0 0.0
    %441 = vmatpush2.msra.mxu0 0.0
    %442 = vmatprep.subr.mxu0 0.0
    %443 = vmatpush2.msra.mxu0 0.0
    %444 = vmatprep.mubr.f32.mxu0 0.0
    %445 = vmatmul.mubr.f32.gmra.mxu0 %v77
    %v446 = vpop.f32.mrf.mxu0
    %v447 = vadd.f32 %v58, %v446
    %v448 = vpop.f32.mrf.mxu0
    %v449 = vadd.f32 %v58, %v448
    %450 = vmatprep.mubr.f32.mxu0 0.0
    %451 = vmatmul.mubr.f32.gmra.mxu0 %v80
    %v452 = vpop.f32.mrf.mxu0
    %v453 = vadd.f32 %v63, %v452
    %v454 = vpop.f32.mrf.mxu0
    %v455 = vadd.f32 %v63, %v454
    %456 = vmatprep.mubr.f32.mxu0 0.0
    %457 = vmatmul.mubr.f32.gmra.mxu0 %v83
    %v458 = vpop.f32.mrf.mxu0
    %v459 = vadd.f32 %v68, %v458
    %v460 = vpop.f32.mrf.mxu0
    %v461 = vadd.f32 %v68, %v460
    %462 = vmatprep.mubr.f32.mxu0 0.0
    %463 = vmatmul.mubr.f32.gmra.mxu0 %v86
    %v464 = vpop.f32.mrf.mxu0
    %v465 = vadd.f32 %v73, %v464
    %v466 = vpop.f32.mrf.mxu0
    %v467 = vadd.f32 %v73, %v466
    %468 = vdwg.mxu0
    %v469 = vtanh.pop %v180
    %v470 = vtanh.pop %v182
    %v471 = vtanh.pop %v269
    %v472 = vtanh.pop %v271
    %v473 = vtanh.pop %v358
    %v474 = vtanh.pop %v360
    %v475 = vtanh.pop %v447
    %v476 = vtanh.pop %v449
    %v477 = vtanh.pop %v186
    %v478 = vtanh.pop %v188
    %v479 = vtanh.pop %v275
    %v480 = vtanh.pop %v277
    %v481 = vtanh.pop %v364
    %v482 = vtanh.pop %v366
    %v483 = vtanh.pop %v453
    %v484 = vtanh.pop %v455
    %v485 = vtanh.pop %v192
    %v486 = vtanh.pop %v194
    %v487 = vtanh.pop %v281
    %v488 = vtanh.pop %v283
    %v489 = vtanh.pop %v370
    %v490 = vtanh.pop %v372
    %v491 = vtanh.pop %v459
    %v492 = vtanh.pop %v461
    %v493 = vtanh.pop %v198
    %v494 = vtanh.pop %v200
    %v495 = vtanh.pop %v287
    %v496 = vtanh.pop %v289
    %v497 = vtanh.pop %v376
    %v498 = vtanh.pop %v378
    %v499 = vtanh.pop %v465
    %v500 = vtanh.pop %v467
    %v501 = vld [vmem:[%s3] sm:$0xff]
    %v502 = vld [vmem:[%s3 + $0x8] sm:$0xff]
    %v503 = vld [vmem:[%s3 + $0x10] sm:$0xff]
    %v504 = vld [vmem:[%s3 + $0x18] sm:$0xff]
    %v505 = vld [vmem:[%s4] sm:$0xff]
    %v506 = vld [vmem:[%s4 + $0x8] sm:$0xff]
    %v507 = vld [vmem:[%s4 + $0x10] sm:$0xff]
    %v508 = vld [vmem:[%s4 + $0x18] sm:$0xff]
    %510 = vset.pattern.permute.xlu0 0
    %511 = vperm.xlu0 %510, %v505
    %v512 = vpop.permute.xlu0 %511
    %515 = vset.pattern.permute.xlu0 0
    %516 = vperm.xlu0 %515, %v506
    %v517 = vpop.permute.xlu0 %516
    %520 = vset.pattern.permute.xlu0 0
    %521 = vperm.xlu0 %520, %v507
    %v522 = vpop.permute.xlu0 %521
    %525 = vset.pattern.permute.xlu0 0
    %526 = vperm.xlu0 %525, %v508
    %v527 = vpop.permute.xlu0 %526
    %vm529 = vcmask 261120
    %v531 = vsel %vm529, %v501, 0
    %v534 = vsel %vm529, %v502, 0
    %v537 = vsel %vm529, %v503, 0
    %v540 = vsel %vm529, %v504, 0
    %542 = vmatprep.subr.mxu0 0.0
    %543 = vmatpush1.msra.mxu0 0.0
    %544 = vmatprep.subr.mxu0 0.0
    %545 = vmatpush1.msra.mxu0 0.0
    %546 = vmatprep.subr.mxu0 0.0
    %547 = vmatpush1.msra.mxu0 0.0
    %548 = vmatprep.subr.mxu0 0.0
    %549 = vmatpush1.msra.mxu0 0.0
    %550 = vmatprep.subr.mxu0 0.0
    %551 = vmatpush1.msra.mxu0 0.0
    %552 = vmatprep.subr.mxu0 0.0
    %553 = vmatpush1.msra.mxu0 0.0
    %554 = vmatprep.subr.mxu0 0.0
    %555 = vmatpush1.msra.mxu0 0.0
    %556 = vmatprep.subr.mxu0 0.0
    %557 = vmatpush1.msra.mxu0 0.0
    %558 = vmatprep.subr.mxu0 0.0
    %559 = vmatpush1.msra.mxu0 0.0
    %560 = vmatprep.subr.mxu0 0.0
    %561 = vmatpush1.msra.mxu0 0.0
    %562 = vmatprep.subr.mxu0 0.0
    %563 = vmatpush1.msra.mxu0 0.0
    %564 = vmatprep.subr.mxu0 0.0
    %565 = vmatpush1.msra.mxu0 0.0
    %566 = vmatprep.subr.mxu0 %v494
    %567 = vmatpush1.msra.mxu0 %v493
    %568 = vmatprep.subr.mxu0 %v486
    %569 = vmatpush1.msra.mxu0 %v485
    %570 = vmatprep.subr.mxu0 %v478
    %571 = vmatpush1.msra.mxu0 %v477
    %572 = vmatprep.subr.mxu0 %v470
    %573 = vmatpush1.msra.mxu0 %v469
    %574 = vmatprep.subr.mxu0 0.0
    %575 = vmatpush2.msra.mxu0 0.0
    %576 = vmatprep.subr.mxu0 0.0
    %577 = vmatpush2.msra.mxu0 0.0
    %578 = vmatprep.subr.mxu0 0.0
    %579 = vmatpush2.msra.mxu0 0.0
    %580 = vmatprep.subr.mxu0 0.0
    %581 = vmatpush2.msra.mxu0 0.0
    %582 = vmatprep.subr.mxu0 0.0
    %583 = vmatpush2.msra.mxu0 0.0
    %584 = vmatprep.subr.mxu0 0.0
    %585 = vmatpush2.msra.mxu0 0.0
    %586 = vmatprep.subr.mxu0 0.0
    %587 = vmatpush2.msra.mxu0 0.0
    %588 = vmatprep.subr.mxu0 0.0
    %589 = vmatpush2.msra.mxu0 0.0
    %590 = vmatprep.subr.mxu0 0.0
    %591 = vmatpush2.msra.mxu0 0.0
    %592 = vmatprep.subr.mxu0 0.0
    %593 = vmatpush2.msra.mxu0 0.0
    %594 = vmatprep.subr.mxu0 0.0
    %595 = vmatpush2.msra.mxu0 0.0
    %596 = vmatprep.subr.mxu0 0.0
    %597 = vmatpush2.msra.mxu0 0.0
    %598 = vmatprep.subr.mxu0 0.0
    %599 = vmatpush2.msra.mxu0 0.0
    %600 = vmatprep.subr.mxu0 0.0
    %601 = vmatpush2.msra.mxu0 0.0
    %602 = vmatprep.subr.mxu0 0.0
    %603 = vmatpush2.msra.mxu0 0.0
    %604 = vmatprep.subr.mxu0 0.0
    %605 = vmatpush2.msra.mxu0 0.0
    %606 = vmatprep.mubr.f32.mxu0 0.0
    %607 = vmatmul.mubr.f32.gmra.mxu0 %v531
    %v608 = vpop.f32.mrf.mxu0
    %v609 = vadd.f32 %v512, %v608
    %v610 = vpop.f32.mrf.mxu0
    %v611 = vadd.f32 %v512, %v610
    %612 = vmatprep.mubr.f32.mxu0 0.0
    %613 = vmatmul.mubr.f32.gmra.mxu0 %v534
    %v614 = vpop.f32.mrf.mxu0
    %v615 = vadd.f32 %v517, %v614
    %v616 = vpop.f32.mrf.mxu0
    %v617 = vadd.f32 %v517, %v616
    %618 = vmatprep.mubr.f32.mxu0 0.0
    %619 = vmatmul.mubr.f32.gmra.mxu0 %v537
    %v620 = vpop.f32.mrf.mxu0
    %v621 = vadd.f32 %v522, %v620
    %v622 = vpop.f32.mrf.mxu0
    %v623 = vadd.f32 %v522, %v622
    %624 = vmatprep.mubr.f32.mxu0 0.0
    %625 = vmatmul.mubr.f32.gmra.mxu0 %v540
    %v626 = vpop.f32.mrf.mxu0
    %v627 = vadd.f32 %v527, %v626
    %v628 = vpop.f32.mrf.mxu0
    %v629 = vadd.f32 %v527, %v628
    %630 = vdwg.mxu0
    %631 = vmatprep.subr.mxu0 0.0
    %632 = vmatpush1.msra.mxu0 0.0
    %633 = vmatprep.subr.mxu0 0.0
    %634 = vmatpush1.msra.mxu0 0.0
    %635 = vmatprep.subr.mxu0 0.0
    %636 = vmatpush1.msra.mxu0 0.0
    %637 = vmatprep.subr.mxu0 0.0
    %638 = vmatpush1.msra.mxu0 0.0
    %639 = vmatprep.subr.mxu0 0.0
    %640 = vmatpush1.msra.mxu0 0.0
    %641 = vmatprep.subr.mxu0 0.0
    %642 = vmatpush1.msra.mxu0 0.0
    %643 = vmatprep.subr.mxu0 0.0
    %644 = vmatpush1.msra.mxu0 0.0
    %645 = vmatprep.subr.mxu0 0.0
    %646 = vmatpush1.msra.mxu0 0.0
    %647 = vmatprep.subr.mxu0 0.0
    %648 = vmatpush1.msra.mxu0 0.0
    %649 = vmatprep.subr.mxu0 0.0
    %650 = vmatpush1.msra.mxu0 0.0
    %651 = vmatprep.subr.mxu0 0.0
    %652 = vmatpush1.msra.mxu0 0.0
    %653 = vmatprep.subr.mxu0 0.0
    %654 = vmatpush1.msra.mxu0 0.0
    %655 = vmatprep.subr.mxu0 %v496
    %656 = vmatpush1.msra.mxu0 %v495
    %657 = vmatprep.subr.mxu0 %v488
    %658 = vmatpush1.msra.mxu0 %v487
    %659 = vmatprep.subr.mxu0 %v480
    %660 = vmatpush1.msra.mxu0 %v479
    %661 = vmatprep.subr.mxu0 %v472
    %662 = vmatpush1.msra.mxu0 %v471
    %663 = vmatprep.subr.mxu0 0.0
    %664 = vmatpush2.msra.mxu0 0.0
    %665 = vmatprep.subr.mxu0 0.0
    %666 = vmatpush2.msra.mxu0 0.0
    %667 = vmatprep.subr.mxu0 0.0
    %668 = vmatpush2.msra.mxu0 0.0
    %669 = vmatprep.subr.mxu0 0.0
    %670 = vmatpush2.msra.mxu0 0.0
    %671 = vmatprep.subr.mxu0 0.0
    %672 = vmatpush2.msra.mxu0 0.0
    %673 = vmatprep.subr.mxu0 0.0
    %674 = vmatpush2.msra.mxu0 0.0
    %675 = vmatprep.subr.mxu0 0.0
    %676 = vmatpush2.msra.mxu0 0.0
    %677 = vmatprep.subr.mxu0 0.0
    %678 = vmatpush2.msra.mxu0 0.0
    %679 = vmatprep.subr.mxu0 0.0
    %680 = vmatpush2.msra.mxu0 0.0
    %681 = vmatprep.subr.mxu0 0.0
    %682 = vmatpush2.msra.mxu0 0.0
    %683 = vmatprep.subr.mxu0 0.0
    %684 = vmatpush2.msra.mxu0 0.0
    %685 = vmatprep.subr.mxu0 0.0
    %686 = vmatpush2.msra.mxu0 0.0
    %687 = vmatprep.subr.mxu0 0.0
    %688 = vmatpush2.msra.mxu0 0.0
    %689 = vmatprep.subr.mxu0 0.0
    %690 = vmatpush2.msra.mxu0 0.0
    %691 = vmatprep.subr.mxu0 0.0
    %692 = vmatpush2.msra.mxu0 0.0
    %693 = vmatprep.subr.mxu0 0.0
    %694 = vmatpush2.msra.mxu0 0.0
    %695 = vmatprep.mubr.f32.mxu0 0.0
    %696 = vmatmul.mubr.f32.gmra.mxu0 %v531
    %v697 = vpop.f32.mrf.mxu0
    %v698 = vadd.f32 %v512, %v697
    %v699 = vpop.f32.mrf.mxu0
    %v700 = vadd.f32 %v512, %v699
    %701 = vmatprep.mubr.f32.mxu0 0.0
    %702 = vmatmul.mubr.f32.gmra.mxu0 %v534
    %v703 = vpop.f32.mrf.mxu0
    %v704 = vadd.f32 %v517, %v703
    %v705 = vpop.f32.mrf.mxu0
    %v706 = vadd.f32 %v517, %v705
    %707 = vmatprep.mubr.f32.mxu0 0.0
    %708 = vmatmul.mubr.f32.gmra.mxu0 %v537
    %v709 = vpop.f32.mrf.mxu0
    %v710 = vadd.f32 %v522, %v709
    %v711 = vpop.f32.mrf.mxu0
    %v712 = vadd.f32 %v522, %v711
    %713 = vmatprep.mubr.f32.mxu0 0.0
    %714 = vmatmul.mubr.f32.gmra.mxu0 %v540
    %v715 = vpop.f32.mrf.mxu0
    %v716 = vadd.f32 %v527, %v715
    %v717 = vpop.f32.mrf.mxu0
    %v718 = vadd.f32 %v527, %v717
    %719 = vdwg.mxu0
    %720 = vmatprep.subr.mxu0 0.0
    %721 = vmatpush1.msra.mxu0 0.0
    %722 = vmatprep.subr.mxu0 0.0
    %723 = vmatpush1.msra.mxu0 0.0
    %724 = vmatprep.subr.mxu0 0.0
    %725 = vmatpush1.msra.mxu0 0.0
    %726 = vmatprep.subr.mxu0 0.0
    %727 = vmatpush1.msra.mxu0 0.0
    %728 = vmatprep.subr.mxu0 0.0
    %729 = vmatpush1.msra.mxu0 0.0
    %730 = vmatprep.subr.mxu0 0.0
    %731 = vmatpush1.msra.mxu0 0.0
    %732 = vmatprep.subr.mxu0 0.0
    %733 = vmatpush1.msra.mxu0 0.0
    %734 = vmatprep.subr.mxu0 0.0
    %735 = vmatpush1.msra.mxu0 0.0
    %736 = vmatprep.subr.mxu0 0.0
    %737 = vmatpush1.msra.mxu0 0.0
    %738 = vmatprep.subr.mxu0 0.0
    %739 = vmatpush1.msra.mxu0 0.0
    %740 = vmatprep.subr.mxu0 0.0
    %741 = vmatpush1.msra.mxu0 0.0
    %742 = vmatprep.subr.mxu0 0.0
    %743 = vmatpush1.msra.mxu0 0.0
    %744 = vmatprep.subr.mxu0 %v498
    %745 = vmatpush1.msra.mxu0 %v497
    %746 = vmatprep.subr.mxu0 %v490
    %747 = vmatpush1.msra.mxu0 %v489
    %748 = vmatprep.subr.mxu0 %v482
    %749 = vmatpush1.msra.mxu0 %v481
    %750 = vmatprep.subr.mxu0 %v474
    %751 = vmatpush1.msra.mxu0 %v473
    %752 = vmatprep.subr.mxu0 0.0
    %753 = vmatpush2.msra.mxu0 0.0
    %754 = vmatprep.subr.mxu0 0.0
    %755 = vmatpush2.msra.mxu0 0.0
    %756 = vmatprep.subr.mxu0 0.0
    %757 = vmatpush2.msra.mxu0 0.0
    %758 = vmatprep.subr.mxu0 0.0
    %759 = vmatpush2.msra.mxu0 0.0
    %760 = vmatprep.subr.mxu0 0.0
    %761 = vmatpush2.msra.mxu0 0.0
    %762 = vmatprep.subr.mxu0 0.0
    %763 = vmatpush2.msra.mxu0 0.0
    %764 = vmatprep.subr.mxu0 0.0
    %765 = vmatpush2.msra.mxu0 0.0
    %766 = vmatprep.subr.mxu0 0.0
    %767 = vmatpush2.msra.mxu0 0.0
    %768 = vmatprep.subr.mxu0 0.0
    %769 = vmatpush2.msra.mxu0 0.0
    %770 = vmatprep.subr.mxu0 0.0
    %771 = vmatpush2.msra.mxu0 0.0
    %772 = vmatprep.subr.mxu0 0.0
    %773 = vmatpush2.msra.mxu0 0.0
    %774 = vmatprep.subr.mxu0 0.0
    %775 = vmatpush2.msra.mxu0 0.0
    %776 = vmatprep.subr.mxu0 0.0
    %777 = vmatpush2.msra.mxu0 0.0
    %778 = vmatprep.subr.mxu0 0.0
    %779 = vmatpush2.msra.mxu0 0.0
    %780 = vmatprep.subr.mxu0 0.0
    %781 = vmatpush2.msra.mxu0 0.0
    %782 = vmatprep.subr.mxu0 0.0
    %783 = vmatpush2.msra.mxu0 0.0
    %784 = vmatprep.mubr.f32.mxu0 0.0
    %785 = vmatmul.mubr.f32.gmra.mxu0 %v531
    %v786 = vpop.f32.mrf.mxu0
    %v787 = vadd.f32 %v512, %v786
    %v788 = vpop.f32.mrf.mxu0
    %v789 = vadd.f32 %v512, %v788
    %790 = vmatprep.mubr.f32.mxu0 0.0
    %791 = vmatmul.mubr.f32.gmra.mxu0 %v534
    %v792 = vpop.f32.mrf.mxu0
    %v793 = vadd.f32 %v517, %v792
    %v794 = vpop.f32.mrf.mxu0
    %v795 = vadd.f32 %v517, %v794
    %796 = vmatprep.mubr.f32.mxu0 0.0
    %797 = vmatmul.mubr.f32.gmra.mxu0 %v537
    %v798 = vpop.f32.mrf.mxu0
    %v799 = vadd.f32 %v522, %v798
    %v800 = vpop.f32.mrf.mxu0
    %v801 = vadd.f32 %v522, %v800
    %802 = vmatprep.mubr.f32.mxu0 0.0
    %803 = vmatmul.mubr.f32.gmra.mxu0 %v540
    %v804 = vpop.f32.mrf.mxu0
    %v805 = vadd.f32 %v527, %v804
    %v806 = vpop.f32.mrf.mxu0
    %v807 = vadd.f32 %v527, %v806
    %808 = vdwg.mxu0
    %809 = vmatprep.subr.mxu0 0.0
    %810 = vmatpush1.msra.mxu0 0.0
    %811 = vmatprep.subr.mxu0 0.0
    %812 = vmatpush1.msra.mxu0 0.0
    %813 = vmatprep.subr.mxu0 0.0
    %814 = vmatpush1.msra.mxu0 0.0
    %815 = vmatprep.subr.mxu0 0.0
    %816 = vmatpush1.msra.mxu0 0.0
    %817 = vmatprep.subr.mxu0 0.0
    %818 = vmatpush1.msra.mxu0 0.0
    %819 = vmatprep.subr.mxu0 0.0
    %820 = vmatpush1.msra.mxu0 0.0
    %821 = vmatprep.subr.mxu0 0.0
    %822 = vmatpush1.msra.mxu0 0.0
    %823 = vmatprep.subr.mxu0 0.0
    %824 = vmatpush1.msra.mxu0 0.0
    %825 = vmatprep.subr.mxu0 0.0
    %826 = vmatpush1.msra.mxu0 0.0
    %827 = vmatprep.subr.mxu0 0.0
    %828 = vmatpush1.msra.mxu0 0.0
    %829 = vmatprep.subr.mxu0 0.0
    %830 = vmatpush1.msra.mxu0 0.0
    %831 = vmatprep.subr.mxu0 0.0
    %832 = vmatpush1.msra.mxu0 0.0
    %833 = vmatprep.subr.mxu0 %v500
    %834 = vmatpush1.msra.mxu0 %v499
    %835 = vmatprep.subr.mxu0 %v492
    %836 = vmatpush1.msra.mxu0 %v491
    %837 = vmatprep.subr.mxu0 %v484
    %838 = vmatpush1.msra.mxu0 %v483
    %839 = vmatprep.subr.mxu0 %v476
    %840 = vmatpush1.msra.mxu0 %v475
    %841 = vmatprep.subr.mxu0 0.0
    %842 = vmatpush2.msra.mxu0 0.0
    %843 = vmatprep.subr.mxu0 0.0
    %844 = vmatpush2.msra.mxu0 0.0
    %845 = vmatprep.subr.mxu0 0.0
    %846 = vmatpush2.msra.mxu0 0.0
    %847 = vmatprep.subr.mxu0 0.0
    %848 = vmatpush2.msra.mxu0 0.0
    %849 = vmatprep.subr.mxu0 0.0
    %850 = vmatpush2.msra.mxu0 0.0
    %851 = vmatprep.subr.mxu0 0.0
    %852 = vmatpush2.msra.mxu0 0.0
    %853 = vmatprep.subr.mxu0 0.0
    %854 = vmatpush2.msra.mxu0 0.0
    %855 = vmatprep.subr.mxu0 0.0
    %856 = vmatpush2.msra.mxu0 0.0
    %857 = vmatprep.subr.mxu0 0.0
    %858 = vmatpush2.msra.mxu0 0.0
    %859 = vmatprep.subr.mxu0 0.0
    %860 = vmatpush2.msra.mxu0 0.0
    %861 = vmatprep.subr.mxu0 0.0
    %862 = vmatpush2.msra.mxu0 0.0
    %863 = vmatprep.subr.mxu0 0.0
    %864 = vmatpush2.msra.mxu0 0.0
    %865 = vmatprep.subr.mxu0 0.0
    %866 = vmatpush2.msra.mxu0 0.0
    %867 = vmatprep.subr.mxu0 0.0
    %868 = vmatpush2.msra.mxu0 0.0
    %869 = vmatprep.subr.mxu0 0.0
    %870 = vmatpush2.msra.mxu0 0.0
    %871 = vmatprep.subr.mxu0 0.0
    %872 = vmatpush2.msra.mxu0 0.0
    %873 = vmatprep.mubr.f32.mxu0 0.0
    %874 = vmatmul.mubr.f32.gmra.mxu0 %v531
    %v875 = vpop.f32.mrf.mxu0
    %v876 = vadd.f32 %v512, %v875
    %v877 = vpop.f32.mrf.mxu0
    %v878 = vadd.f32 %v512, %v877
    %879 = vmatprep.mubr.f32.mxu0 0.0
    %880 = vmatmul.mubr.f32.gmra.mxu0 %v534
    %v881 = vpop.f32.mrf.mxu0
    %v882 = vadd.f32 %v517, %v881
    %v883 = vpop.f32.mrf.mxu0
    %v884 = vadd.f32 %v517, %v883
    %885 = vmatprep.mubr.f32.mxu0 0.0
    %886 = vmatmul.mubr.f32.gmra.mxu0 %v537
    %v887 = vpop.f32.mrf.mxu0
    %v888 = vadd.f32 %v522, %v887
    %v889 = vpop.f32.mrf.mxu0
    %v890 = vadd.f32 %v522, %v889
    %891 = vmatprep.mubr.f32.mxu0 0.0
    %892 = vmatmul.mubr.f32.gmra.mxu0 %v540
    %v893 = vpop.f32.mrf.mxu0
    %v894 = vadd.f32 %v527, %v893
    %v895 = vpop.f32.mrf.mxu0
    %v896 = vadd.f32 %v527, %v895
    %897 = vdwg.mxu0
    %v898 = vtanh.pop %v609
    %v899 = vtanh.pop %v611
    %v900 = vtanh.pop %v698
    %v901 = vtanh.pop %v700
    %v902 = vtanh.pop %v787
    %v903 = vtanh.pop %v789
    %v904 = vtanh.pop %v876
    %v905 = vtanh.pop %v878
    %v906 = vtanh.pop %v615
    %v907 = vtanh.pop %v617
    %v908 = vtanh.pop %v704
    %v909 = vtanh.pop %v706
    %v910 = vtanh.pop %v793
    %v911 = vtanh.pop %v795
    %v912 = vtanh.pop %v882
    %v913 = vtanh.pop %v884
    %v914 = vtanh.pop %v621
    %v915 = vtanh.pop %v623
    %v916 = vtanh.pop %v710
    %v917 = vtanh.pop %v712
    %v918 = vtanh.pop %v799
    %v919 = vtanh.pop %v801
    %v920 = vtanh.pop %v888
    %v921 = vtanh.pop %v890
    %v922 = vtanh.pop %v627
    %v923 = vtanh.pop %v629
    %v924 = vtanh.pop %v716
    %v925 = vtanh.pop %v718
    %v926 = vtanh.pop %v805
    %v927 = vtanh.pop %v807
    %v928 = vtanh.pop %v894
    %v929 = vtanh.pop %v896
    %v930 = vld [vmem:[%s5] sm:$0xff]
    %v931 = vld [vmem:[%s5 + $0x8] sm:$0xff]
    %v932 = vld [vmem:[%s5 + $0x10] sm:$0xff]
    %v933 = vld [vmem:[%s5 + $0x18] sm:$0xff]
    %v934 = vld [vmem:[%s6] sm:$0xff]
    %v935 = vld [vmem:[%s6 + $0x8] sm:$0xff]
    %v936 = vld [vmem:[%s6 + $0x10] sm:$0xff]
    %v937 = vld [vmem:[%s6 + $0x18] sm:$0xff]
    %939 = vset.pattern.permute.xlu0 0
    %940 = vperm.xlu0 %939, %v934
    %v941 = vpop.permute.xlu0 %940
    %944 = vset.pattern.permute.xlu0 0
    %945 = vperm.xlu0 %944, %v935
    %v946 = vpop.permute.xlu0 %945
    %949 = vset.pattern.permute.xlu0 0
    %950 = vperm.xlu0 %949, %v936
    %v951 = vpop.permute.xlu0 %950
    %954 = vset.pattern.permute.xlu0 0
    %955 = vperm.xlu0 %954, %v937
    %v956 = vpop.permute.xlu0 %955
    %v959 = vsel %vm529, %v930, 0
    %v962 = vsel %vm529, %v931, 0
    %v965 = vsel %vm529, %v932, 0
    %v968 = vsel %vm529, %v933, 0
    %970 = vmatprep.subr.mxu0 0.0
    %971 = vmatpush1.msra.mxu0 0.0
    %972 = vmatprep.subr.mxu0 0.0
    %973 = vmatpush1.msra.mxu0 0.0
    %974 = vmatprep.subr.mxu0 0.0
    %975 = vmatpush1.msra.mxu0 0.0
    %976 = vmatprep.subr.mxu0 0.0
    %977 = vmatpush1.msra.mxu0 0.0
    %978 = vmatprep.subr.mxu0 0.0
    %979 = vmatpush1.msra.mxu0 0.0
    %980 = vmatprep.subr.mxu0 0.0
    %981 = vmatpush1.msra.mxu0 0.0
    %982 = vmatprep.subr.mxu0 0.0
    %983 = vmatpush1.msra.mxu0 0.0
    %984 = vmatprep.subr.mxu0 0.0
    %985 = vmatpush1.msra.mxu0 0.0
    %986 = vmatprep.subr.mxu0 0.0
    %987 = vmatpush1.msra.mxu0 0.0
    %988 = vmatprep.subr.mxu0 0.0
    %989 = vmatpush1.msra.mxu0 0.0
    %990 = vmatprep.subr.mxu0 0.0
    %991 = vmatpush1.msra.mxu0 0.0
    %992 = vmatprep.subr.mxu0 0.0
    %993 = vmatpush1.msra.mxu0 0.0
    %994 = vmatprep.subr.mxu0 %v923
    %995 = vmatpush1.msra.mxu0 %v922
    %996 = vmatprep.subr.mxu0 %v915
    %997 = vmatpush1.msra.mxu0 %v914
    %998 = vmatprep.subr.mxu0 %v907
    %999 = vmatpush1.msra.mxu0 %v906
    %1000 = vmatprep.subr.mxu0 %v899
    %1001 = vmatpush1.msra.mxu0 %v898
    %1002 = vmatprep.subr.mxu0 0.0
    %1003 = vmatpush2.msra.mxu0 0.0
    %1004 = vmatprep.subr.mxu0 0.0
    %1005 = vmatpush2.msra.mxu0 0.0
    %1006 = vmatprep.subr.mxu0 0.0
    %1007 = vmatpush2.msra.mxu0 0.0
    %1008 = vmatprep.subr.mxu0 0.0
    %1009 = vmatpush2.msra.mxu0 0.0
    %1010 = vmatprep.subr.mxu0 0.0
    %1011 = vmatpush2.msra.mxu0 0.0
    %1012 = vmatprep.subr.mxu0 0.0
    %1013 = vmatpush2.msra.mxu0 0.0
    %1014 = vmatprep.subr.mxu0 0.0
    %1015 = vmatpush2.msra.mxu0 0.0
    %1016 = vmatprep.subr.mxu0 0.0
    %1017 = vmatpush2.msra.mxu0 0.0
    %1018 = vmatprep.subr.mxu0 0.0
    %1019 = vmatpush2.msra.mxu0 0.0
    %1020 = vmatprep.subr.mxu0 0.0
    %1021 = vmatpush2.msra.mxu0 0.0
    %1022 = vmatprep.subr.mxu0 0.0
    %1023 = vmatpush2.msra.mxu0 0.0
    %1024 = vmatprep.subr.mxu0 0.0
    %1025 = vmatpush2.msra.mxu0 0.0
    %1026 = vmatprep.subr.mxu0 0.0
    %1027 = vmatpush2.msra.mxu0 0.0
    %1028 = vmatprep.subr.mxu0 0.0
    %1029 = vmatpush2.msra.mxu0 0.0
    %1030 = vmatprep.subr.mxu0 0.0
    %1031 = vmatpush2.msra.mxu0 0.0
    %1032 = vmatprep.subr.mxu0 0.0
    %1033 = vmatpush2.msra.mxu0 0.0
    %1034 = vmatprep.mubr.f32.mxu0 0.0
    %1035 = vmatmul.mubr.f32.gmra.mxu0 %v959
    %v1036 = vpop.f32.mrf.mxu0
    %v1037 = vadd.f32 %v941, %v1036
    %v1038 = vpop.f32.mrf.mxu0
    %v1039 = vadd.f32 %v941, %v1038
    %1040 = vmatprep.mubr.f32.mxu0 0.0
    %1041 = vmatmul.mubr.f32.gmra.mxu0 %v962
    %v1042 = vpop.f32.mrf.mxu0
    %v1043 = vadd.f32 %v946, %v1042
    %v1044 = vpop.f32.mrf.mxu0
    %v1045 = vadd.f32 %v946, %v1044
    %1046 = vmatprep.mubr.f32.mxu0 0.0
    %1047 = vmatmul.mubr.f32.gmra.mxu0 %v965
    %v1048 = vpop.f32.mrf.mxu0
    %v1049 = vadd.f32 %v951, %v1048
    %v1050 = vpop.f32.mrf.mxu0
    %v1051 = vadd.f32 %v951, %v1050
    %1052 = vmatprep.mubr.f32.mxu0 0.0
    %1053 = vmatmul.mubr.f32.gmra.mxu0 %v968
    %v1054 = vpop.f32.mrf.mxu0
    %v1055 = vadd.f32 %v956, %v1054
    %v1056 = vpop.f32.mrf.mxu0
    %v1057 = vadd.f32 %v956, %v1056
    %1058 = vdwg.mxu0
    %1059 = vmatprep.subr.mxu0 0.0
    %1060 = vmatpush1.msra.mxu0 0.0
    %1061 = vmatprep.subr.mxu0 0.0
    %1062 = vmatpush1.msra.mxu0 0.0
    %1063 = vmatprep.subr.mxu0 0.0
    %1064 = vmatpush1.msra.mxu0 0.0
    %1065 = vmatprep.subr.mxu0 0.0
    %1066 = vmatpush1.msra.mxu0 0.0
    %1067 = vmatprep.subr.mxu0 0.0
    %1068 = vmatpush1.msra.mxu0 0.0
    %1069 = vmatprep.subr.mxu0 0.0
    %1070 = vmatpush1.msra.mxu0 0.0
    %1071 = vmatprep.subr.mxu0 0.0
    %1072 = vmatpush1.msra.mxu0 0.0
    %1073 = vmatprep.subr.mxu0 0.0
    %1074 = vmatpush1.msra.mxu0 0.0
    %1075 = vmatprep.subr.mxu0 0.0
    %1076 = vmatpush1.msra.mxu0 0.0
    %1077 = vmatprep.subr.mxu0 0.0
    %1078 = vmatpush1.msra.mxu0 0.0
    %1079 = vmatprep.subr.mxu0 0.0
    %1080 = vmatpush1.msra.mxu0 0.0
    %1081 = vmatprep.subr.mxu0 0.0
    %1082 = vmatpush1.msra.mxu0 0.0
    %1083 = vmatprep.subr.mxu0 %v925
    %1084 = vmatpush1.msra.mxu0 %v924
    %1085 = vmatprep.subr.mxu0 %v917
    %1086 = vmatpush1.msra.mxu0 %v916
    %1087 = vmatprep.subr.mxu0 %v909
    %1088 = vmatpush1.msra.mxu0 %v908
    %1089 = vmatprep.subr.mxu0 %v901
    %1090 = vmatpush1.msra.mxu0 %v900
    %1091 = vmatprep.subr.mxu0 0.0
    %1092 = vmatpush2.msra.mxu0 0.0
    %1093 = vmatprep.subr.mxu0 0.0
    %1094 = vmatpush2.msra.mxu0 0.0
    %1095 = vmatprep.subr.mxu0 0.0
    %1096 = vmatpush2.msra.mxu0 0.0
    %1097 = vmatprep.subr.mxu0 0.0
    %1098 = vmatpush2.msra.mxu0 0.0
    %1099 = vmatprep.subr.mxu0 0.0
    %1100 = vmatpush2.msra.mxu0 0.0
    %1101 = vmatprep.subr.mxu0 0.0
    %1102 = vmatpush2.msra.mxu0 0.0
    %1103 = vmatprep.subr.mxu0 0.0
    %1104 = vmatpush2.msra.mxu0 0.0
    %1105 = vmatprep.subr.mxu0 0.0
    %1106 = vmatpush2.msra.mxu0 0.0
    %1107 = vmatprep.subr.mxu0 0.0
    %1108 = vmatpush2.msra.mxu0 0.0
    %1109 = vmatprep.subr.mxu0 0.0
    %1110 = vmatpush2.msra.mxu0 0.0
    %1111 = vmatprep.subr.mxu0 0.0
    %1112 = vmatpush2.msra.mxu0 0.0
    %1113 = vmatprep.subr.mxu0 0.0
    %1114 = vmatpush2.msra.mxu0 0.0
    %1115 = vmatprep.subr.mxu0 0.0
    %1116 = vmatpush2.msra.mxu0 0.0
    %1117 = vmatprep.subr.mxu0 0.0
    %1118 = vmatpush2.msra.mxu0 0.0
    %1119 = vmatprep.subr.mxu0 0.0
    %1120 = vmatpush2.msra.mxu0 0.0
    %1121 = vmatprep.subr.mxu0 0.0
    %1122 = vmatpush2.msra.mxu0 0.0
    %1123 = vmatprep.mubr.f32.mxu0 0.0
    %1124 = vmatmul.mubr.f32.gmra.mxu0 %v959
    %v1125 = vpop.f32.mrf.mxu0
    %v1126 = vadd.f32 %v941, %v1125
    %v1127 = vpop.f32.mrf.mxu0
    %v1128 = vadd.f32 %v941, %v1127
    %1129 = vmatprep.mubr.f32.mxu0 0.0
    %1130 = vmatmul.mubr.f32.gmra.mxu0 %v962
    %v1131 = vpop.f32.mrf.mxu0
    %v1132 = vadd.f32 %v946, %v1131
    %v1133 = vpop.f32.mrf.mxu0
    %v1134 = vadd.f32 %v946, %v1133
    %1135 = vmatprep.mubr.f32.mxu0 0.0
    %1136 = vmatmul.mubr.f32.gmra.mxu0 %v965
    %v1137 = vpop.f32.mrf.mxu0
    %v1138 = vadd.f32 %v951, %v1137
    %v1139 = vpop.f32.mrf.mxu0
    %v1140 = vadd.f32 %v951, %v1139
    %1141 = vmatprep.mubr.f32.mxu0 0.0
    %1142 = vmatmul.mubr.f32.gmra.mxu0 %v968
    %v1143 = vpop.f32.mrf.mxu0
    %v1144 = vadd.f32 %v956, %v1143
    %v1145 = vpop.f32.mrf.mxu0
    %v1146 = vadd.f32 %v956, %v1145
    %1147 = vdwg.mxu0
    %1148 = vmatprep.subr.mxu0 0.0
    %1149 = vmatpush1.msra.mxu0 0.0
    %1150 = vmatprep.subr.mxu0 0.0
    %1151 = vmatpush1.msra.mxu0 0.0
    %1152 = vmatprep.subr.mxu0 0.0
    %1153 = vmatpush1.msra.mxu0 0.0
    %1154 = vmatprep.subr.mxu0 0.0
    %1155 = vmatpush1.msra.mxu0 0.0
    %1156 = vmatprep.subr.mxu0 0.0
    %1157 = vmatpush1.msra.mxu0 0.0
    %1158 = vmatprep.subr.mxu0 0.0
    %1159 = vmatpush1.msra.mxu0 0.0
    %1160 = vmatprep.subr.mxu0 0.0
    %1161 = vmatpush1.msra.mxu0 0.0
    %1162 = vmatprep.subr.mxu0 0.0
    %1163 = vmatpush1.msra.mxu0 0.0
    %1164 = vmatprep.subr.mxu0 0.0
    %1165 = vmatpush1.msra.mxu0 0.0
    %1166 = vmatprep.subr.mxu0 0.0
    %1167 = vmatpush1.msra.mxu0 0.0
    %1168 = vmatprep.subr.mxu0 0.0
    %1169 = vmatpush1.msra.mxu0 0.0
    %1170 = vmatprep.subr.mxu0 0.0
    %1171 = vmatpush1.msra.mxu0 0.0
    %1172 = vmatprep.subr.mxu0 %v927
    %1173 = vmatpush1.msra.mxu0 %v926
    %1174 = vmatprep.subr.mxu0 %v919
    %1175 = vmatpush1.msra.mxu0 %v918
    %1176 = vmatprep.subr.mxu0 %v911
    %1177 = vmatpush1.msra.mxu0 %v910
    %1178 = vmatprep.subr.mxu0 %v903
    %1179 = vmatpush1.msra.mxu0 %v902
    %1180 = vmatprep.subr.mxu0 0.0
    %1181 = vmatpush2.msra.mxu0 0.0
    %1182 = vmatprep.subr.mxu0 0.0
    %1183 = vmatpush2.msra.mxu0 0.0
    %1184 = vmatprep.subr.mxu0 0.0
    %1185 = vmatpush2.msra.mxu0 0.0
    %1186 = vmatprep.subr.mxu0 0.0
    %1187 = vmatpush2.msra.mxu0 0.0
    %1188 = vmatprep.subr.mxu0 0.0
    %1189 = vmatpush2.msra.mxu0 0.0
    %1190 = vmatprep.subr.mxu0 0.0
    %1191 = vmatpush2.msra.mxu0 0.0
    %1192 = vmatprep.subr.mxu0 0.0
    %1193 = vmatpush2.msra.mxu0 0.0
    %1194 = vmatprep.subr.mxu0 0.0
    %1195 = vmatpush2.msra.mxu0 0.0
    %1196 = vmatprep.subr.mxu0 0.0
    %1197 = vmatpush2.msra.mxu0 0.0
    %1198 = vmatprep.subr.mxu0 0.0
    %1199 = vmatpush2.msra.mxu0 0.0
    %1200 = vmatprep.subr.mxu0 0.0
    %1201 = vmatpush2.msra.mxu0 0.0
    %1202 = vmatprep.subr.mxu0 0.0
    %1203 = vmatpush2.msra.mxu0 0.0
    %1204 = vmatprep.subr.mxu0 0.0
    %1205 = vmatpush2.msra.mxu0 0.0
    %1206 = vmatprep.subr.mxu0 0.0
    %1207 = vmatpush2.msra.mxu0 0.0
    %1208 = vmatprep.subr.mxu0 0.0
    %1209 = vmatpush2.msra.mxu0 0.0
    %1210 = vmatprep.subr.mxu0 0.0
    %1211 = vmatpush2.msra.mxu0 0.0
    %1212 = vmatprep.mubr.f32.mxu0 0.0
    %1213 = vmatmul.mubr.f32.gmra.mxu0 %v959
    %v1214 = vpop.f32.mrf.mxu0
    %v1215 = vadd.f32 %v941, %v1214
    %v1216 = vpop.f32.mrf.mxu0
    %v1217 = vadd.f32 %v941, %v1216
    %1218 = vmatprep.mubr.f32.mxu0 0.0
    %1219 = vmatmul.mubr.f32.gmra.mxu0 %v962
    %v1220 = vpop.f32.mrf.mxu0
    %v1221 = vadd.f32 %v946, %v1220
    %v1222 = vpop.f32.mrf.mxu0
    %v1223 = vadd.f32 %v946, %v1222
    %1224 = vmatprep.mubr.f32.mxu0 0.0
    %1225 = vmatmul.mubr.f32.gmra.mxu0 %v965
    %v1226 = vpop.f32.mrf.mxu0
    %v1227 = vadd.f32 %v951, %v1226
    %v1228 = vpop.f32.mrf.mxu0
    %v1229 = vadd.f32 %v951, %v1228
    %1230 = vmatprep.mubr.f32.mxu0 0.0
    %1231 = vmatmul.mubr.f32.gmra.mxu0 %v968
    %v1232 = vpop.f32.mrf.mxu0
    %v1233 = vadd.f32 %v956, %v1232
    %v1234 = vpop.f32.mrf.mxu0
    %v1235 = vadd.f32 %v956, %v1234
    %1236 = vdwg.mxu0
    %1237 = vmatprep.subr.mxu0 0.0
    %1238 = vmatpush1.msra.mxu0 0.0
    %1239 = vmatprep.subr.mxu0 0.0
    %1240 = vmatpush1.msra.mxu0 0.0
    %1241 = vmatprep.subr.mxu0 0.0
    %1242 = vmatpush1.msra.mxu0 0.0
    %1243 = vmatprep.subr.mxu0 0.0
    %1244 = vmatpush1.msra.mxu0 0.0
    %1245 = vmatprep.subr.mxu0 0.0
    %1246 = vmatpush1.msra.mxu0 0.0
    %1247 = vmatprep.subr.mxu0 0.0
    %1248 = vmatpush1.msra.mxu0 0.0
    %1249 = vmatprep.subr.mxu0 0.0
    %1250 = vmatpush1.msra.mxu0 0.0
    %1251 = vmatprep.subr.mxu0 0.0
    %1252 = vmatpush1.msra.mxu0 0.0
    %1253 = vmatprep.subr.mxu0 0.0
    %1254 = vmatpush1.msra.mxu0 0.0
    %1255 = vmatprep.subr.mxu0 0.0
    %1256 = vmatpush1.msra.mxu0 0.0
    %1257 = vmatprep.subr.mxu0 0.0
    %1258 = vmatpush1.msra.mxu0 0.0
    %1259 = vmatprep.subr.mxu0 0.0
    %1260 = vmatpush1.msra.mxu0 0.0
    %1261 = vmatprep.subr.mxu0 %v929
    %1262 = vmatpush1.msra.mxu0 %v928
    %1263 = vmatprep.subr.mxu0 %v921
    %1264 = vmatpush1.msra.mxu0 %v920
    %1265 = vmatprep.subr.mxu0 %v913
    %1266 = vmatpush1.msra.mxu0 %v912
    %1267 = vmatprep.subr.mxu0 %v905
    %1268 = vmatpush1.msra.mxu0 %v904
    %1269 = vmatprep.subr.mxu0 0.0
    %1270 = vmatpush2.msra.mxu0 0.0
    %1271 = vmatprep.subr.mxu0 0.0
    %1272 = vmatpush2.msra.mxu0 0.0
    %1273 = vmatprep.subr.mxu0 0.0
    %1274 = vmatpush2.msra.mxu0 0.0
    %1275 = vmatprep.subr.mxu0 0.0
    %1276 = vmatpush2.msra.mxu0 0.0
    %1277 = vmatprep.subr.mxu0 0.0
    %1278 = vmatpush2.msra.mxu0 0.0
    %1279 = vmatprep.subr.mxu0 0.0
    %1280 = vmatpush2.msra.mxu0 0.0
    %1281 = vmatprep.subr.mxu0 0.0
    %1282 = vmatpush2.msra.mxu0 0.0
    %1283 = vmatprep.subr.mxu0 0.0
    %1284 = vmatpush2.msra.mxu0 0.0
    %1285 = vmatprep.subr.mxu0 0.0
    %1286 = vmatpush2.msra.mxu0 0.0
    %1287 = vmatprep.subr.mxu0 0.0
    %1288 = vmatpush2.msra.mxu0 0.0
    %1289 = vmatprep.subr.mxu0 0.0
    %1290 = vmatpush2.msra.mxu0 0.0
    %1291 = vmatprep.subr.mxu0 0.0
    %1292 = vmatpush2.msra.mxu0 0.0
    %1293 = vmatprep.subr.mxu0 0.0
    %1294 = vmatpush2.msra.mxu0 0.0
    %1295 = vmatprep.subr.mxu0 0.0
    %1296 = vmatpush2.msra.mxu0 0.0
    %1297 = vmatprep.subr.mxu0 0.0
    %1298 = vmatpush2.msra.mxu0 0.0
    %1299 = vmatprep.subr.mxu0 0.0
    %1300 = vmatpush2.msra.mxu0 0.0
    %1301 = vmatprep.mubr.f32.mxu0 0.0
    %1302 = vmatmul.mubr.f32.gmra.mxu0 %v959
    %v1303 = vpop.f32.mrf.mxu0
    %v1304 = vadd.f32 %v941, %v1303
    %v1305 = vpop.f32.mrf.mxu0
    %v1306 = vadd.f32 %v941, %v1305
    %1307 = vmatprep.mubr.f32.mxu0 0.0
    %1308 = vmatmul.mubr.f32.gmra.mxu0 %v962
    %v1309 = vpop.f32.mrf.mxu0
    %v1310 = vadd.f32 %v946, %v1309
    %v1311 = vpop.f32.mrf.mxu0
    %v1312 = vadd.f32 %v946, %v1311
    %1313 = vmatprep.mubr.f32.mxu0 0.0
    %1314 = vmatmul.mubr.f32.gmra.mxu0 %v965
    %v1315 = vpop.f32.mrf.mxu0
    %v1316 = vadd.f32 %v951, %v1315
    %v1317 = vpop.f32.mrf.mxu0
    %v1318 = vadd.f32 %v951, %v1317
    %1319 = vmatprep.mubr.f32.mxu0 0.0
    %1320 = vmatmul.mubr.f32.gmra.mxu0 %v968
    %v1321 = vpop.f32.mrf.mxu0
    %v1322 = vadd.f32 %v956, %v1321
    %v1323 = vpop.f32.mrf.mxu0
    %v1324 = vadd.f32 %v956, %v1323
    %1325 = vdwg.mxu0
    %v1326 = vtanh.pop %v1037
    %v1327 = vtanh.pop %v1039
    %v1328 = vtanh.pop %v1126
    %v1329 = vtanh.pop %v1128
    %v1330 = vtanh.pop %v1215
    %v1331 = vtanh.pop %v1217
    %v1332 = vtanh.pop %v1304
    %v1333 = vtanh.pop %v1306
    %v1334 = vtanh.pop %v1043
    %v1335 = vtanh.pop %v1045
    %v1336 = vtanh.pop %v1132
    %v1337 = vtanh.pop %v1134
    %v1338 = vtanh.pop %v1221
    %v1339 = vtanh.pop %v1223
    %v1340 = vtanh.pop %v1310
    %v1341 = vtanh.pop %v1312
    %v1342 = vtanh.pop %v1049
    %v1343 = vtanh.pop %v1051
    %v1344 = vtanh.pop %v1138
    %v1345 = vtanh.pop %v1140
    %v1346 = vtanh.pop %v1227
    %v1347 = vtanh.pop %v1229
    %v1348 = vtanh.pop %v1316
    %v1349 = vtanh.pop %v1318
    %v1350 = vtanh.pop %v1055
    %v1351 = vtanh.pop %v1057
    %v1352 = vtanh.pop %v1144
    %v1353 = vtanh.pop %v1146
    %v1354 = vtanh.pop %v1233
    %v1355 = vtanh.pop %v1235
    %v1356 = vtanh.pop %v1322
    %v1357 = vtanh.pop %v1324
    %v1358 = vld [vmem:[%s7] sm:$0xff]
    %v1359 = vld [vmem:[%s7 + $0x8] sm:$0xff]
    %v1360 = vld [vmem:[%s7 + $0x10] sm:$0xff]
    %v1361 = vld [vmem:[%s7 + $0x18] sm:$0xff]
    %v1362 = vld [vmem:[%s8] sm:$0xff]
    %v1363 = vld [vmem:[%s8 + $0x8] sm:$0xff]
    %v1364 = vld [vmem:[%s8 + $0x10] sm:$0xff]
    %v1365 = vld [vmem:[%s8 + $0x18] sm:$0xff]
    %1367 = vset.pattern.permute.xlu0 0
    %1368 = vperm.xlu0 %1367, %v1362
    %v1369 = vpop.permute.xlu0 %1368
    %1372 = vset.pattern.permute.xlu0 0
    %1373 = vperm.xlu0 %1372, %v1363
    %v1374 = vpop.permute.xlu0 %1373
    %1377 = vset.pattern.permute.xlu0 0
    %1378 = vperm.xlu0 %1377, %v1364
    %v1379 = vpop.permute.xlu0 %1378
    %1382 = vset.pattern.permute.xlu0 0
    %1383 = vperm.xlu0 %1382, %v1365
    %v1384 = vpop.permute.xlu0 %1383
    %v1387 = vsel %vm529, %v1358, 0
    %v1390 = vsel %vm529, %v1359, 0
    %v1393 = vsel %vm529, %v1360, 0
    %v1396 = vsel %vm529, %v1361, 0
    %1398 = vmatprep.subr.mxu0 0.0
    %1399 = vmatpush1.msra.mxu0 0.0
    %1400 = vmatprep.subr.mxu0 0.0
    %1401 = vmatpush1.msra.mxu0 0.0
    %1402 = vmatprep.subr.mxu0 0.0
    %1403 = vmatpush1.msra.mxu0 0.0
    %1404 = vmatprep.subr.mxu0 0.0
    %1405 = vmatpush1.msra.mxu0 0.0
    %1406 = vmatprep.subr.mxu0 0.0
    %1407 = vmatpush1.msra.mxu0 0.0
    %1408 = vmatprep.subr.mxu0 0.0
    %1409 = vmatpush1.msra.mxu0 0.0
    %1410 = vmatprep.subr.mxu0 0.0
    %1411 = vmatpush1.msra.mxu0 0.0
    %1412 = vmatprep.subr.mxu0 0.0
    %1413 = vmatpush1.msra.mxu0 0.0
    %1414 = vmatprep.subr.mxu0 0.0
    %1415 = vmatpush1.msra.mxu0 0.0
    %1416 = vmatprep.subr.mxu0 0.0
    %1417 = vmatpush1.msra.mxu0 0.0
    %1418 = vmatprep.subr.mxu0 0.0
    %1419 = vmatpush1.msra.mxu0 0.0
    %1420 = vmatprep.subr.mxu0 0.0
    %1421 = vmatpush1.msra.mxu0 0.0
    %1422 = vmatprep.subr.mxu0 %v1351
    %1423 = vmatpush1.msra.mxu0 %v1350
    %1424 = vmatprep.subr.mxu0 %v1343
    %1425 = vmatpush1.msra.mxu0 %v1342
    %1426 = vmatprep.subr.mxu0 %v1335
    %1427 = vmatpush1.msra.mxu0 %v1334
    %1428 = vmatprep.subr.mxu0 %v1327
    %1429 = vmatpush1.msra.mxu0 %v1326
    %1430 = vmatprep.subr.mxu0 0.0
    %1431 = vmatpush2.msra.mxu0 0.0
    %1432 = vmatprep.subr.mxu0 0.0
    %1433 = vmatpush2.msra.mxu0 0.0
    %1434 = vmatprep.subr.mxu0 0.0
    %1435 = vmatpush2.msra.mxu0 0.0
    %1436 = vmatprep.subr.mxu0 0.0
    %1437 = vmatpush2.msra.mxu0 0.0
    %1438 = vmatprep.subr.mxu0 0.0
    %1439 = vmatpush2.msra.mxu0 0.0
    %1440 = vmatprep.subr.mxu0 0.0
    %1441 = vmatpush2.msra.mxu0 0.0
    %1442 = vmatprep.subr.mxu0 0.0
    %1443 = vmatpush2.msra.mxu0 0.0
    %1444 = vmatprep.subr.mxu0 0.0
    %1445 = vmatpush2.msra.mxu0 0.0
    %1446 = vmatprep.subr.mxu0 0.0
    %1447 = vmatpush2.msra.mxu0 0.0
    %1448 = vmatprep.subr.mxu0 0.0
    %1449 = vmatpush2.msra.mxu0 0.0
    %1450 = vmatprep.subr.mxu0 0.0
    %1451 = vmatpush2.msra.mxu0 0.0
    %1452 = vmatprep.subr.mxu0 0.0
    %1453 = vmatpush2.msra.mxu0 0.0
    %1454 = vmatprep.subr.mxu0 0.0
    %1455 = vmatpush2.msra.mxu0 0.0
    %1456 = vmatprep.subr.mxu0 0.0
    %1457 = vmatpush2.msra.mxu0 0.0
    %1458 = vmatprep.subr.mxu0 0.0
    %1459 = vmatpush2.msra.mxu0 0.0
    %1460 = vmatprep.subr.mxu0 0.0
    %1461 = vmatpush2.msra.mxu0 0.0
    %1462 = vmatprep.mubr.f32.mxu0 0.0
    %1463 = vmatmul.mubr.f32.gmra.mxu0 %v1387
    %v1464 = vpop.f32.mrf.mxu0
    %v1465 = vadd.f32 %v1369, %v1464
    %v1466 = vpop.f32.mrf.mxu0
    %v1467 = vadd.f32 %v1369, %v1466
    %1468 = vmatprep.mubr.f32.mxu0 0.0
    %1469 = vmatmul.mubr.f32.gmra.mxu0 %v1390
    %v1470 = vpop.f32.mrf.mxu0
    %v1471 = vadd.f32 %v1374, %v1470
    %v1472 = vpop.f32.mrf.mxu0
    %v1473 = vadd.f32 %v1374, %v1472
    %1474 = vmatprep.mubr.f32.mxu0 0.0
    %1475 = vmatmul.mubr.f32.gmra.mxu0 %v1393
    %v1476 = vpop.f32.mrf.mxu0
    %v1477 = vadd.f32 %v1379, %v1476
    %v1478 = vpop.f32.mrf.mxu0
    %v1479 = vadd.f32 %v1379, %v1478
    %1480 = vmatprep.mubr.f32.mxu0 0.0
    %1481 = vmatmul.mubr.f32.gmra.mxu0 %v1396
    %v1482 = vpop.f32.mrf.mxu0
    %v1483 = vadd.f32 %v1384, %v1482
    %v1484 = vpop.f32.mrf.mxu0
    %v1485 = vadd.f32 %v1384, %v1484
    %1486 = vdwg.mxu0
    %1487 = vmatprep.subr.mxu0 0.0
    %1488 = vmatpush1.msra.mxu0 0.0
    %1489 = vmatprep.subr.mxu0 0.0
    %1490 = vmatpush1.msra.mxu0 0.0
    %1491 = vmatprep.subr.mxu0 0.0
    %1492 = vmatpush1.msra.mxu0 0.0
    %1493 = vmatprep.subr.mxu0 0.0
    %1494 = vmatpush1.msra.mxu0 0.0
    %1495 = vmatprep.subr.mxu0 0.0
    %1496 = vmatpush1.msra.mxu0 0.0
    %1497 = vmatprep.subr.mxu0 0.0
    %1498 = vmatpush1.msra.mxu0 0.0
    %1499 = vmatprep.subr.mxu0 0.0
    %1500 = vmatpush1.msra.mxu0 0.0
    %1501 = vmatprep.subr.mxu0 0.0
    %1502 = vmatpush1.msra.mxu0 0.0
    %1503 = vmatprep.subr.mxu0 0.0
    %1504 = vmatpush1.msra.mxu0 0.0
    %1505 = vmatprep.subr.mxu0 0.0
    %1506 = vmatpush1.msra.mxu0 0.0
    %1507 = vmatprep.subr.mxu0 0.0
    %1508 = vmatpush1.msra.mxu0 0.0
    %1509 = vmatprep.subr.mxu0 0.0
    %1510 = vmatpush1.msra.mxu0 0.0
    %1511 = vmatprep.subr.mxu0 %v1353
    %1512 = vmatpush1.msra.mxu0 %v1352
    %1513 = vmatprep.subr.mxu0 %v1345
    %1514 = vmatpush1.msra.mxu0 %v1344
    %1515 = vmatprep.subr.mxu0 %v1337
    %1516 = vmatpush1.msra.mxu0 %v1336
    %1517 = vmatprep.subr.mxu0 %v1329
    %1518 = vmatpush1.msra.mxu0 %v1328
    %1519 = vmatprep.subr.mxu0 0.0
    %1520 = vmatpush2.msra.mxu0 0.0
    %1521 = vmatprep.subr.mxu0 0.0
    %1522 = vmatpush2.msra.mxu0 0.0
    %1523 = vmatprep.subr.mxu0 0.0
    %1524 = vmatpush2.msra.mxu0 0.0
    %1525 = vmatprep.subr.mxu0 0.0
    %1526 = vmatpush2.msra.mxu0 0.0
    %1527 = vmatprep.subr.mxu0 0.0
    %1528 = vmatpush2.msra.mxu0 0.0
    %1529 = vmatprep.subr.mxu0 0.0
    %1530 = vmatpush2.msra.mxu0 0.0
    %1531 = vmatprep.subr.mxu0 0.0
    %1532 = vmatpush2.msra.mxu0 0.0
    %1533 = vmatprep.subr.mxu0 0.0
    %1534 = vmatpush2.msra.mxu0 0.0
    %1535 = vmatprep.subr.mxu0 0.0
    %1536 = vmatpush2.msra.mxu0 0.0
    %1537 = vmatprep.subr.mxu0 0.0
    %1538 = vmatpush2.msra.mxu0 0.0
    %1539 = vmatprep.subr.mxu0 0.0
    %1540 = vmatpush2.msra.mxu0 0.0
    %1541 = vmatprep.subr.mxu0 0.0
    %1542 = vmatpush2.msra.mxu0 0.0
    %1543 = vmatprep.subr.mxu0 0.0
    %1544 = vmatpush2.msra.mxu0 0.0
    %1545 = vmatprep.subr.mxu0 0.0
    %1546 = vmatpush2.msra.mxu0 0.0
    %1547 = vmatprep.subr.mxu0 0.0
    %1548 = vmatpush2.msra.mxu0 0.0
    %1549 = vmatprep.subr.mxu0 0.0
    %1550 = vmatpush2.msra.mxu0 0.0
    %1551 = vmatprep.mubr.f32.mxu0 0.0
    %1552 = vmatmul.mubr.f32.gmra.mxu0 %v1387
    %v1553 = vpop.f32.mrf.mxu0
    %v1554 = vadd.f32 %v1369, %v1553
    %v1555 = vpop.f32.mrf.mxu0
    %v1556 = vadd.f32 %v1369, %v1555
    %1557 = vmatprep.mubr.f32.mxu0 0.0
    %1558 = vmatmul.mubr.f32.gmra.mxu0 %v1390
    %v1559 = vpop.f32.mrf.mxu0
    %v1560 = vadd.f32 %v1374, %v1559
    %v1561 = vpop.f32.mrf.mxu0
    %v1562 = vadd.f32 %v1374, %v1561
    %1563 = vmatprep.mubr.f32.mxu0 0.0
    %1564 = vmatmul.mubr.f32.gmra.mxu0 %v1393
    %v1565 = vpop.f32.mrf.mxu0
    %v1566 = vadd.f32 %v1379, %v1565
    %v1567 = vpop.f32.mrf.mxu0
    %v1568 = vadd.f32 %v1379, %v1567
    %1569 = vmatprep.mubr.f32.mxu0 0.0
    %1570 = vmatmul.mubr.f32.gmra.mxu0 %v1396
    %v1571 = vpop.f32.mrf.mxu0
    %v1572 = vadd.f32 %v1384, %v1571
    %v1573 = vpop.f32.mrf.mxu0
    %v1574 = vadd.f32 %v1384, %v1573
    %1575 = vdwg.mxu0
    %1576 = vmatprep.subr.mxu0 0.0
    %1577 = vmatpush1.msra.mxu0 0.0
    %1578 = vmatprep.subr.mxu0 0.0
    %1579 = vmatpush1.msra.mxu0 0.0
    %1580 = vmatprep.subr.mxu0 0.0
    %1581 = vmatpush1.msra.mxu0 0.0
    %1582 = vmatprep.subr.mxu0 0.0
    %1583 = vmatpush1.msra.mxu0 0.0
    %1584 = vmatprep.subr.mxu0 0.0
    %1585 = vmatpush1.msra.mxu0 0.0
    %1586 = vmatprep.subr.mxu0 0.0
    %1587 = vmatpush1.msra.mxu0 0.0
    %1588 = vmatprep.subr.mxu0 0.0
    %1589 = vmatpush1.msra.mxu0 0.0
    %1590 = vmatprep.subr.mxu0 0.0
    %1591 = vmatpush1.msra.mxu0 0.0
    %1592 = vmatprep.subr.mxu0 0.0
    %1593 = vmatpush1.msra.mxu0 0.0
    %1594 = vmatprep.subr.mxu0 0.0
    %1595 = vmatpush1.msra.mxu0 0.0
    %1596 = vmatprep.subr.mxu0 0.0
    %1597 = vmatpush1.msra.mxu0 0.0
    %1598 = vmatprep.subr.mxu0 0.0
    %1599 = vmatpush1.msra.mxu0 0.0
    %1600 = vmatprep.subr.mxu0 %v1355
    %1601 = vmatpush1.msra.mxu0 %v1354
    %1602 = vmatprep.subr.mxu0 %v1347
    %1603 = vmatpush1.msra.mxu0 %v1346
    %1604 = vmatprep.subr.mxu0 %v1339
    %1605 = vmatpush1.msra.mxu0 %v1338
    %1606 = vmatprep.subr.mxu0 %v1331
    %1607 = vmatpush1.msra.mxu0 %v1330
    %1608 = vmatprep.subr.mxu0 0.0
    %1609 = vmatpush2.msra.mxu0 0.0
    %1610 = vmatprep.subr.mxu0 0.0
    %1611 = vmatpush2.msra.mxu0 0.0
    %1612 = vmatprep.subr.mxu0 0.0
    %1613 = vmatpush2.msra.mxu0 0.0
    %1614 = vmatprep.subr.mxu0 0.0
    %1615 = vmatpush2.msra.mxu0 0.0
    %1616 = vmatprep.subr.mxu0 0.0
    %1617 = vmatpush2.msra.mxu0 0.0
    %1618 = vmatprep.subr.mxu0 0.0
    %1619 = vmatpush2.msra.mxu0 0.0
    %1620 = vmatprep.subr.mxu0 0.0
    %1621 = vmatpush2.msra.mxu0 0.0
    %1622 = vmatprep.subr.mxu0 0.0
    %1623 = vmatpush2.msra.mxu0 0.0
    %1624 = vmatprep.subr.mxu0 0.0
    %1625 = vmatpush2.msra.mxu0 0.0
    %1626 = vmatprep.subr.mxu0 0.0
    %1627 = vmatpush2.msra.mxu0 0.0
    %1628 = vmatprep.subr.mxu0 0.0
    %1629 = vmatpush2.msra.mxu0 0.0
    %1630 = vmatprep.subr.mxu0 0.0
    %1631 = vmatpush2.msra.mxu0 0.0
    %1632 = vmatprep.subr.mxu0 0.0
    %1633 = vmatpush2.msra.mxu0 0.0
    %1634 = vmatprep.subr.mxu0 0.0
    %1635 = vmatpush2.msra.mxu0 0.0
    %1636 = vmatprep.subr.mxu0 0.0
    %1637 = vmatpush2.msra.mxu0 0.0
    %1638 = vmatprep.subr.mxu0 0.0
    %1639 = vmatpush2.msra.mxu0 0.0
    %1640 = vmatprep.mubr.f32.mxu0 0.0
    %1641 = vmatmul.mubr.f32.gmra.mxu0 %v1387
    %v1642 = vpop.f32.mrf.mxu0
    %v1643 = vadd.f32 %v1369, %v1642
    %v1644 = vpop.f32.mrf.mxu0
    %v1645 = vadd.f32 %v1369, %v1644
    %1646 = vmatprep.mubr.f32.mxu0 0.0
    %1647 = vmatmul.mubr.f32.gmra.mxu0 %v1390
    %v1648 = vpop.f32.mrf.mxu0
    %v1649 = vadd.f32 %v1374, %v1648
    %v1650 = vpop.f32.mrf.mxu0
    %v1651 = vadd.f32 %v1374, %v1650
    %1652 = vmatprep.mubr.f32.mxu0 0.0
    %1653 = vmatmul.mubr.f32.gmra.mxu0 %v1393
    %v1654 = vpop.f32.mrf.mxu0
    %v1655 = vadd.f32 %v1379, %v1654
    %v1656 = vpop.f32.mrf.mxu0
    %v1657 = vadd.f32 %v1379, %v1656
    %1658 = vmatprep.mubr.f32.mxu0 0.0
    %1659 = vmatmul.mubr.f32.gmra.mxu0 %v1396
    %v1660 = vpop.f32.mrf.mxu0
    %v1661 = vadd.f32 %v1384, %v1660
    %v1662 = vpop.f32.mrf.mxu0
    %v1663 = vadd.f32 %v1384, %v1662
    %1664 = vdwg.mxu0
    %1665 = vmatprep.subr.mxu0 0.0
    %1666 = vmatpush1.msra.mxu0 0.0
    %1667 = vmatprep.subr.mxu0 0.0
    %1668 = vmatpush1.msra.mxu0 0.0
    %1669 = vmatprep.subr.mxu0 0.0
    %1670 = vmatpush1.msra.mxu0 0.0
    %1671 = vmatprep.subr.mxu0 0.0
    %1672 = vmatpush1.msra.mxu0 0.0
    %1673 = vmatprep.subr.mxu0 0.0
    %1674 = vmatpush1.msra.mxu0 0.0
    %1675 = vmatprep.subr.mxu0 0.0
    %1676 = vmatpush1.msra.mxu0 0.0
    %1677 = vmatprep.subr.mxu0 0.0
    %1678 = vmatpush1.msra.mxu0 0.0
    %1679 = vmatprep.subr.mxu0 0.0
    %1680 = vmatpush1.msra.mxu0 0.0
    %1681 = vmatprep.subr.mxu0 0.0
    %1682 = vmatpush1.msra.mxu0 0.0
    %1683 = vmatprep.subr.mxu0 0.0
    %1684 = vmatpush1.msra.mxu0 0.0
    %1685 = vmatprep.subr.mxu0 0.0
    %1686 = vmatpush1.msra.mxu0 0.0
    %1687 = vmatprep.subr.mxu0 0.0
    %1688 = vmatpush1.msra.mxu0 0.0
    %1689 = vmatprep.subr.mxu0 %v1357
    %1690 = vmatpush1.msra.mxu0 %v1356
    %1691 = vmatprep.subr.mxu0 %v1349
    %1692 = vmatpush1.msra.mxu0 %v1348
    %1693 = vmatprep.subr.mxu0 %v1341
    %1694 = vmatpush1.msra.mxu0 %v1340
    %1695 = vmatprep.subr.mxu0 %v1333
    %1696 = vmatpush1.msra.mxu0 %v1332
    %1697 = vmatprep.subr.mxu0 0.0
    %1698 = vmatpush2.msra.mxu0 0.0
    %1699 = vmatprep.subr.mxu0 0.0
    %1700 = vmatpush2.msra.mxu0 0.0
    %1701 = vmatprep.subr.mxu0 0.0
    %1702 = vmatpush2.msra.mxu0 0.0
    %1703 = vmatprep.subr.mxu0 0.0
    %1704 = vmatpush2.msra.mxu0 0.0
    %1705 = vmatprep.subr.mxu0 0.0
    %1706 = vmatpush2.msra.mxu0 0.0
    %1707 = vmatprep.subr.mxu0 0.0
    %1708 = vmatpush2.msra.mxu0 0.0
    %1709 = vmatprep.subr.mxu0 0.0
    %1710 = vmatpush2.msra.mxu0 0.0
    %1711 = vmatprep.subr.mxu0 0.0
    %1712 = vmatpush2.msra.mxu0 0.0
    %1713 = vmatprep.subr.mxu0 0.0
    %1714 = vmatpush2.msra.mxu0 0.0
    %1715 = vmatprep.subr.mxu0 0.0
    %1716 = vmatpush2.msra.mxu0 0.0
    %1717 = vmatprep.subr.mxu0 0.0
    %1718 = vmatpush2.msra.mxu0 0.0
    %1719 = vmatprep.subr.mxu0 0.0
    %1720 = vmatpush2.msra.mxu0 0.0
    %1721 = vmatprep.subr.mxu0 0.0
    %1722 = vmatpush2.msra.mxu0 0.0
    %1723 = vmatprep.subr.mxu0 0.0
    %1724 = vmatpush2.msra.mxu0 0.0
    %1725 = vmatprep.subr.mxu0 0.0
    %1726 = vmatpush2.msra.mxu0 0.0
    %1727 = vmatprep.subr.mxu0 0.0
    %1728 = vmatpush2.msra.mxu0 0.0
    %1729 = vmatprep.mubr.f32.mxu0 0.0
    %1730 = vmatmul.mubr.f32.gmra.mxu0 %v1387
    %v1731 = vpop.f32.mrf.mxu0
    %v1732 = vadd.f32 %v1369, %v1731
    %v1733 = vpop.f32.mrf.mxu0
    %v1734 = vadd.f32 %v1369, %v1733
    %1735 = vmatprep.mubr.f32.mxu0 0.0
    %1736 = vmatmul.mubr.f32.gmra.mxu0 %v1390
    %v1737 = vpop.f32.mrf.mxu0
    %v1738 = vadd.f32 %v1374, %v1737
    %v1739 = vpop.f32.mrf.mxu0
    %v1740 = vadd.f32 %v1374, %v1739
    %1741 = vmatprep.mubr.f32.mxu0 0.0
    %1742 = vmatmul.mubr.f32.gmra.mxu0 %v1393
    %v1743 = vpop.f32.mrf.mxu0
    %v1744 = vadd.f32 %v1379, %v1743
    %v1745 = vpop.f32.mrf.mxu0
    %v1746 = vadd.f32 %v1379, %v1745
    %1747 = vmatprep.mubr.f32.mxu0 0.0
    %1748 = vmatmul.mubr.f32.gmra.mxu0 %v1396
    %v1749 = vpop.f32.mrf.mxu0
    %v1750 = vadd.f32 %v1384, %v1749
    %v1751 = vpop.f32.mrf.mxu0
    %v1752 = vadd.f32 %v1384, %v1751
    %1753 = vdwg.mxu0
    %v1754 = vtanh.pop %v1465
    %v1755 = vtanh.pop %v1467
    %v1756 = vtanh.pop %v1554
    %v1757 = vtanh.pop %v1556
    %v1758 = vtanh.pop %v1643
    %v1759 = vtanh.pop %v1645
    %v1760 = vtanh.pop %v1732
    %v1761 = vtanh.pop %v1734
    %v1762 = vtanh.pop %v1471
    %v1763 = vtanh.pop %v1473
    %v1764 = vtanh.pop %v1560
    %v1765 = vtanh.pop %v1562
    %v1766 = vtanh.pop %v1649
    %v1767 = vtanh.pop %v1651
    %v1768 = vtanh.pop %v1738
    %v1769 = vtanh.pop %v1740
    %v1770 = vtanh.pop %v1477
    %v1771 = vtanh.pop %v1479
    %v1772 = vtanh.pop %v1566
    %v1773 = vtanh.pop %v1568
    %v1774 = vtanh.pop %v1655
    %v1775 = vtanh.pop %v1657
    %v1776 = vtanh.pop %v1744
    %v1777 = vtanh.pop %v1746
    %v1778 = vtanh.pop %v1483
    %v1779 = vtanh.pop %v1485
    %v1780 = vtanh.pop %v1572
    %v1781 = vtanh.pop %v1574
    %v1782 = vtanh.pop %v1661
    %v1783 = vtanh.pop %v1663
    %v1784 = vtanh.pop %v1750
    %v1785 = vtanh.pop %v1752
    %v1786 = vld [vmem:[%s9] sm:$0x3]
    %v1787 = vld [vmem:[%s10] sm:$0x3]
    %1789 = vset.pattern.permute.xlu0 0
    %1790 = vperm.xlu0 %1789, %v1787
    %v1791 = vpop.permute.xlu0 %1790
    %v1794 = vsel %vm529, %v1786, 0
    %1796 = vmatprep.subr.mxu0 0.0
    %1797 = vmatpush1.msra.mxu0 0.0
    %1798 = vmatprep.subr.mxu0 0.0
    %1799 = vmatpush1.msra.mxu0 0.0
    %1800 = vmatprep.subr.mxu0 0.0
    %1801 = vmatpush1.msra.mxu0 0.0
    %1802 = vmatprep.subr.mxu0 0.0
    %1803 = vmatpush1.msra.mxu0 0.0
    %1804 = vmatprep.subr.mxu0 0.0
    %1805 = vmatpush1.msra.mxu0 0.0
    %1806 = vmatprep.subr.mxu0 0.0
    %1807 = vmatpush1.msra.mxu0 0.0
    %1808 = vmatprep.subr.mxu0 0.0
    %1809 = vmatpush1.msra.mxu0 0.0
    %1810 = vmatprep.subr.mxu0 0.0
    %1811 = vmatpush1.msra.mxu0 0.0
    %1812 = vmatprep.subr.mxu0 0.0
    %1813 = vmatpush1.msra.mxu0 0.0
    %1814 = vmatprep.subr.mxu0 0.0
    %1815 = vmatpush1.msra.mxu0 0.0
    %1816 = vmatprep.subr.mxu0 0.0
    %1817 = vmatpush1.msra.mxu0 0.0
    %1818 = vmatprep.subr.mxu0 0.0
    %1819 = vmatpush1.msra.mxu0 0.0
    %1820 = vmatprep.subr.mxu0 %v1779
    %1821 = vmatpush1.msra.mxu0 %v1778
    %1822 = vmatprep.subr.mxu0 %v1771
    %1823 = vmatpush1.msra.mxu0 %v1770
    %1824 = vmatprep.subr.mxu0 %v1763
    %1825 = vmatpush1.msra.mxu0 %v1762
    %1826 = vmatprep.subr.mxu0 %v1755
    %1827 = vmatpush1.msra.mxu0 %v1754
    %1828 = vmatprep.subr.mxu0 0.0
    %1829 = vmatpush2.msra.mxu0 0.0
    %1830 = vmatprep.subr.mxu0 0.0
    %1831 = vmatpush2.msra.mxu0 0.0
    %1832 = vmatprep.subr.mxu0 0.0
    %1833 = vmatpush2.msra.mxu0 0.0
    %1834 = vmatprep.subr.mxu0 0.0
    %1835 = vmatpush2.msra.mxu0 0.0
    %1836 = vmatprep.subr.mxu0 0.0
    %1837 = vmatpush2.msra.mxu0 0.0
    %1838 = vmatprep.subr.mxu0 0.0
    %1839 = vmatpush2.msra.mxu0 0.0
    %1840 = vmatprep.subr.mxu0 0.0
    %1841 = vmatpush2.msra.mxu0 0.0
    %1842 = vmatprep.subr.mxu0 0.0
    %1843 = vmatpush2.msra.mxu0 0.0
    %1844 = vmatprep.subr.mxu0 0.0
    %1845 = vmatpush2.msra.mxu0 0.0
    %1846 = vmatprep.subr.mxu0 0.0
    %1847 = vmatpush2.msra.mxu0 0.0
    %1848 = vmatprep.subr.mxu0 0.0
    %1849 = vmatpush2.msra.mxu0 0.0
    %1850 = vmatprep.subr.mxu0 0.0
    %1851 = vmatpush2.msra.mxu0 0.0
    %1852 = vmatprep.subr.mxu0 0.0
    %1853 = vmatpush2.msra.mxu0 0.0
    %1854 = vmatprep.subr.mxu0 0.0
    %1855 = vmatpush2.msra.mxu0 0.0
    %1856 = vmatprep.subr.mxu0 0.0
    %1857 = vmatpush2.msra.mxu0 0.0
    %1858 = vmatprep.subr.mxu0 0.0
    %1859 = vmatpush2.msra.mxu0 0.0
    %1860 = vmatprep.mubr.f32.mxu0 0.0
    %1861 = vmatmul.mubr.f32.gmra.mxu0 %v1794
    %v1862 = vpop.f32.mrf.mxu0
    %v1863 = vadd.f32 %v1791, %v1862
    %v1864 = vpop.f32.mrf.mxu0
    %v1865 = vadd.f32 %v1791, %v1864
    %1866 = vdwg.mxu0
    %1867 = vmatprep.subr.mxu0 0.0
    %1868 = vmatpush1.msra.mxu0 0.0
    %1869 = vmatprep.subr.mxu0 0.0
    %1870 = vmatpush1.msra.mxu0 0.0
    %1871 = vmatprep.subr.mxu0 0.0
    %1872 = vmatpush1.msra.mxu0 0.0
    %1873 = vmatprep.subr.mxu0 0.0
    %1874 = vmatpush1.msra.mxu0 0.0
    %1875 = vmatprep.subr.mxu0 0.0
    %1876 = vmatpush1.msra.mxu0 0.0
    %1877 = vmatprep.subr.mxu0 0.0
    %1878 = vmatpush1.msra.mxu0 0.0
    %1879 = vmatprep.subr.mxu0 0.0
    %1880 = vmatpush1.msra.mxu0 0.0
    %1881 = vmatprep.subr.mxu0 0.0
    %1882 = vmatpush1.msra.mxu0 0.0
    %1883 = vmatprep.subr.mxu0 0.0
    %1884 = vmatpush1.msra.mxu0 0.0
    %1885 = vmatprep.subr.mxu0 0.0
    %1886 = vmatpush1.msra.mxu0 0.0
    %1887 = vmatprep.subr.mxu0 0.0
    %1888 = vmatpush1.msra.mxu0 0.0
    %1889 = vmatprep.subr.mxu0 0.0
    %1890 = vmatpush1.msra.mxu0 0.0
    %1891 = vmatprep.subr.mxu0 %v1781
    %1892 = vmatpush1.msra.mxu0 %v1780
    %1893 = vmatprep.subr.mxu0 %v1773
    %1894 = vmatpush1.msra.mxu0 %v1772
    %1895 = vmatprep.subr.mxu0 %v1765
    %1896 = vmatpush1.msra.mxu0 %v1764
    %1897 = vmatprep.subr.mxu0 %v1757
    %1898 = vmatpush1.msra.mxu0 %v1756
    %1899 = vmatprep.subr.mxu0 0.0
    %1900 = vmatpush2.msra.mxu0 0.0
    %1901 = vmatprep.subr.mxu0 0.0
    %1902 = vmatpush2.msra.mxu0 0.0
    %1903 = vmatprep.subr.mxu0 0.0
    %1904 = vmatpush2.msra.mxu0 0.0
    %1905 = vmatprep.subr.mxu0 0.0
    %1906 = vmatpush2.msra.mxu0 0.0
    %1907 = vmatprep.subr.mxu0 0.0
    %1908 = vmatpush2.msra.mxu0 0.0
    %1909 = vmatprep.subr.mxu0 0.0
    %1910 = vmatpush2.msra.mxu0 0.0
    %1911 = vmatprep.subr.mxu0 0.0
    %1912 = vmatpush2.msra.mxu0 0.0
    %1913 = vmatprep.subr.mxu0 0.0
    %1914 = vmatpush2.msra.mxu0 0.0
    %1915 = vmatprep.subr.mxu0 0.0
    %1916 = vmatpush2.msra.mxu0 0.0
    %1917 = vmatprep.subr.mxu0 0.0
    %1918 = vmatpush2.msra.mxu0 0.0
    %1919 = vmatprep.subr.mxu0 0.0
    %1920 = vmatpush2.msra.mxu0 0.0
    %1921 = vmatprep.subr.mxu0 0.0
    %1922 = vmatpush2.msra.mxu0 0.0
    %1923 = vmatprep.subr.mxu0 0.0
    %1924 = vmatpush2.msra.mxu0 0.0
    %1925 = vmatprep.subr.mxu0 0.0
    %1926 = vmatpush2.msra.mxu0 0.0
    %1927 = vmatprep.subr.mxu0 0.0
    %1928 = vmatpush2.msra.mxu0 0.0
    %1929 = vmatprep.subr.mxu0 0.0
    %1930 = vmatpush2.msra.mxu0 0.0
    %1931 = vmatprep.mubr.f32.mxu0 0.0
    %1932 = vmatmul.mubr.f32.gmra.mxu0 %v1794
    %v1933 = vpop.f32.mrf.mxu0
    %v1934 = vadd.f32 %v1791, %v1933
    %v1935 = vpop.f32.mrf.mxu0
    %v1936 = vadd.f32 %v1791, %v1935
    %1937 = vdwg.mxu0
    %1938 = vmatprep.subr.mxu0 0.0
    %1939 = vmatpush1.msra.mxu0 0.0
    %1940 = vmatprep.subr.mxu0 0.0
    %1941 = vmatpush1.msra.mxu0 0.0
    %1942 = vmatprep.subr.mxu0 0.0
    %1943 = vmatpush1.msra.mxu0 0.0
    %1944 = vmatprep.subr.mxu0 0.0
    %1945 = vmatpush1.msra.mxu0 0.0
    %1946 = vmatprep.subr.mxu0 0.0
    %1947 = vmatpush1.msra.mxu0 0.0
    %1948 = vmatprep.subr.mxu0 0.0
    %1949 = vmatpush1.msra.mxu0 0.0
    %1950 = vmatprep.subr.mxu0 0.0
    %1951 = vmatpush1.msra.mxu0 0.0
    %1952 = vmatprep.subr.mxu0 0.0
    %1953 = vmatpush1.msra.mxu0 0.0
    %1954 = vmatprep.subr.mxu0 0.0
    %1955 = vmatpush1.msra.mxu0 0.0
    %1956 = vmatprep.subr.mxu0 0.0
    %1957 = vmatpush1.msra.mxu0 0.0
    %1958 = vmatprep.subr.mxu0 0.0
    %1959 = vmatpush1.msra.mxu0 0.0
    %1960 = vmatprep.subr.mxu0 0.0
    %1961 = vmatpush1.msra.mxu0 0.0
    %1962 = vmatprep.subr.mxu0 %v1783
    %1963 = vmatpush1.msra.mxu0 %v1782
    %1964 = vmatprep.subr.mxu0 %v1775
    %1965 = vmatpush1.msra.mxu0 %v1774
    %1966 = vmatprep.subr.mxu0 %v1767
    %1967 = vmatpush1.msra.mxu0 %v1766
    %1968 = vmatprep.subr.mxu0 %v1759
    %1969 = vmatpush1.msra.mxu0 %v1758
    %1970 = vmatprep.subr.mxu0 0.0
    %1971 = vmatpush2.msra.mxu0 0.0
    %1972 = vmatprep.subr.mxu0 0.0
    %1973 = vmatpush2.msra.mxu0 0.0
    %1974 = vmatprep.subr.mxu0 0.0
    %1975 = vmatpush2.msra.mxu0 0.0
    %1976 = vmatprep.subr.mxu0 0.0
    %1977 = vmatpush2.msra.mxu0 0.0
    %1978 = vmatprep.subr.mxu0 0.0
    %1979 = vmatpush2.msra.mxu0 0.0
    %1980 = vmatprep.subr.mxu0 0.0
    %1981 = vmatpush2.msra.mxu0 0.0
    %1982 = vmatprep.subr.mxu0 0.0
    %1983 = vmatpush2.msra.mxu0 0.0
    %1984 = vmatprep.subr.mxu0 0.0
    %1985 = vmatpush2.msra.mxu0 0.0
    %1986 = vmatprep.subr.mxu0 0.0
    %1987 = vmatpush2.msra.mxu0 0.0
    %1988 = vmatprep.subr.mxu0 0.0
    %1989 = vmatpush2.msra.mxu0 0.0
    %1990 = vmatprep.subr.mxu0 0.0
    %1991 = vmatpush2.msra.mxu0 0.0
    %1992 = vmatprep.subr.mxu0 0.0
    %1993 = vmatpush2.msra.mxu0 0.0
    %1994 = vmatprep.subr.mxu0 0.0
    %1995 = vmatpush2.msra.mxu0 0.0
    %1996 = vmatprep.subr.mxu0 0.0
    %1997 = vmatpush2.msra.mxu0 0.0
    %1998 = vmatprep.subr.mxu0 0.0
    %1999 = vmatpush2.msra.mxu0 0.0
    %2000 = vmatprep.subr.mxu0 0.0
    %2001 = vmatpush2.msra.mxu0 0.0
    %2002 = vmatprep.mubr.f32.mxu0 0.0
    %2003 = vmatmul.mubr.f32.gmra.mxu0 %v1794
    %v2004 = vpop.f32.mrf.mxu0
    %v2005 = vadd.f32 %v1791, %v2004
    %v2006 = vpop.f32.mrf.mxu0
    %v2007 = vadd.f32 %v1791, %v2006
    %2008 = vdwg.mxu0
    %2009 = vmatprep.subr.mxu0 0.0
    %2010 = vmatpush1.msra.mxu0 0.0
    %2011 = vmatprep.subr.mxu0 0.0
    %2012 = vmatpush1.msra.mxu0 0.0
    %2013 = vmatprep.subr.mxu0 0.0
    %2014 = vmatpush1.msra.mxu0 0.0
    %2015 = vmatprep.subr.mxu0 0.0
    %2016 = vmatpush1.msra.mxu0 0.0
    %2017 = vmatprep.subr.mxu0 0.0
    %2018 = vmatpush1.msra.mxu0 0.0
    %2019 = vmatprep.subr.mxu0 0.0
    %2020 = vmatpush1.msra.mxu0 0.0
    %2021 = vmatprep.subr.mxu0 0.0
    %2022 = vmatpush1.msra.mxu0 0.0
    %2023 = vmatprep.subr.mxu0 0.0
    %2024 = vmatpush1.msra.mxu0 0.0
    %2025 = vmatprep.subr.mxu0 0.0
    %2026 = vmatpush1.msra.mxu0 0.0
    %2027 = vmatprep.subr.mxu0 0.0
    %2028 = vmatpush1.msra.mxu0 0.0
    %2029 = vmatprep.subr.mxu0 0.0
    %2030 = vmatpush1.msra.mxu0 0.0
    %2031 = vmatprep.subr.mxu0 0.0
    %2032 = vmatpush1.msra.mxu0 0.0
    %2033 = vmatprep.subr.mxu0 %v1785
    %2034 = vmatpush1.msra.mxu0 %v1784
    %2035 = vmatprep.subr.mxu0 %v1777
    %2036 = vmatpush1.msra.mxu0 %v1776
    %2037 = vmatprep.subr.mxu0 %v1769
    %2038 = vmatpush1.msra.mxu0 %v1768
    %2039 = vmatprep.subr.mxu0 %v1761
    %2040 = vmatpush1.msra.mxu0 %v1760
    %2041 = vmatprep.subr.mxu0 0.0
    %2042 = vmatpush2.msra.mxu0 0.0
    %2043 = vmatprep.subr.mxu0 0.0
    %2044 = vmatpush2.msra.mxu0 0.0
    %2045 = vmatprep.subr.mxu0 0.0
    %2046 = vmatpush2.msra.mxu0 0.0
    %2047 = vmatprep.subr.mxu0 0.0
    %2048 = vmatpush2.msra.mxu0 0.0
    %2049 = vmatprep.subr.mxu0 0.0
    %2050 = vmatpush2.msra.mxu0 0.0
    %2051 = vmatprep.subr.mxu0 0.0
    %2052 = vmatpush2.msra.mxu0 0.0
    %2053 = vmatprep.subr.mxu0 0.0
    %2054 = vmatpush2.msra.mxu0 0.0
    %2055 = vmatprep.subr.mxu0 0.0
    %2056 = vmatpush2.msra.mxu0 0.0
    %2057 = vmatprep.subr.mxu0 0.0
    %2058 = vmatpush2.msra.mxu0 0.0
    %2059 = vmatprep.subr.mxu0 0.0
    %2060 = vmatpush2.msra.mxu0 0.0
    %2061 = vmatprep.subr.mxu0 0.0
    %2062 = vmatpush2.msra.mxu0 0.0
    %2063 = vmatprep.subr.mxu0 0.0
    %2064 = vmatpush2.msra.mxu0 0.0
    %2065 = vmatprep.subr.mxu0 0.0
    %2066 = vmatpush2.msra.mxu0 0.0
    %2067 = vmatprep.subr.mxu0 0.0
    %2068 = vmatpush2.msra.mxu0 0.0
    %2069 = vmatprep.subr.mxu0 0.0
    %2070 = vmatpush2.msra.mxu0 0.0
    %2071 = vmatprep.subr.mxu0 0.0
    %2072 = vmatpush2.msra.mxu0 0.0
    %2073 = vmatprep.mubr.f32.mxu0 0.0
    %2074 = vmatmul.mubr.f32.gmra.mxu0 %v1794
    %v2075 = vpop.f32.mrf.mxu0
    %v2076 = vadd.f32 %v1791, %v2075
    %v2077 = vpop.f32.mrf.mxu0
    %v2078 = vadd.f32 %v1791, %v2077
    %2079 = vdwg.mxu0
    %v2088 = vcombine.low %v1863, %v1865
    %v2089 = vcombine.low %v1934, %v1936
    %v2091 = vunpack.c.l.s4 1983009808
    %v2092 = vunpack.c.0.s8 %v2091
    %v2093 = vlaneseq
    %v2094 = vshrl.u32 %v2093, 7
    %v2095 = vsub.s32 %v2092, %v2094
    %v2096 = vrot.slane %v2088, %v2095
    %v2098 = vunpack.c.l.s4 1983009808
    %v2099 = vunpack.c.0.s8 %v2098
    %v2100 = vlaneseq
    %v2101 = vshrl.u32 %v2100, 7
    %v2102 = vsub.s32 %v2099, %v2101
    %v2103 = vrot.slane %v2089, %v2102
    %v2104 = vcombine.low %v2096, %v2103
    %v2105 = vcombine.low %v2005, %v2007
    %v2106 = vcombine.low %v2076, %v2078
    %v2108 = vunpack.c.l.s4 1983009808
    %v2109 = vunpack.c.0.s8 %v2108
    %v2110 = vlaneseq
    %v2111 = vshrl.u32 %v2110, 7
    %v2112 = vsub.s32 %v2109, %v2111
    %v2113 = vrot.slane %v2105, %v2112
    %v2115 = vunpack.c.l.s4 1983009808
    %v2116 = vunpack.c.0.s8 %v2115
    %v2117 = vlaneseq
    %v2118 = vshrl.u32 %v2117, 7
    %v2119 = vsub.s32 %v2116, %v2118
    %v2120 = vrot.slane %v2106, %v2119
    %v2121 = vcombine.low %v2113, %v2120
    %2124 = vst [vmem:[#allocation2] sm:$0xff] %v2104
    %2125 = vst [vmem:[#allocation2 + $0x8] sm:$0xff] %v2121
    // Predicated region
    $region46: #{tpu_custom_call.1} parent=1 // pred_check
      _
    $region47: #{tpu_custom_call.1} parent=1 // pred_check_branch
      %2127 = sbr.rel (0) target = $region49
    $region48: #{tpu_custom_call.1} parent=1 // pred_region
      %s2129 = ssub.s32 256, 256
      %2130 = vsyncadd [#allocation3], %s2129
      %s2132 = sshll.u32 [#allocation2], 4
      %s2133 = int_to_ptr.vmem [resolvable:$true] %s2132
      %2135 = dma.vmem_to_hbm [thread:$0]  %s2133, 256, %s11, [#allocation3]
    $region49: #{tpu_custom_call.1} parent=1 // pred_fallthru
      _
    // Predicated region
    $region50: #{tpu_custom_call.1} parent=1 // pred_check
      _
    $region51: #{tpu_custom_call.1} parent=1 // pred_check_branch
      %2137 = sbr.rel (0) target = $region53
    $region52: #{tpu_custom_call.1} parent=1 // pred_region
      %2138 = dma.done [#allocation3], 256
    $region53: #{tpu_custom_call.1} parent=1 // pred_fallthru
      _
    %2139 = vsyncpa [#allocation3], 1

</llo_original>
